<compile_context>
chip_gen: v7x
topology: tpu7x:2x2x1
jax: 0.10.0
libtpu: 0.0.40
codegen_flags: <defaults>
</compile_context>

<pallas_src>
import numpy as np

import jax
import jax.numpy as jnp
from jax import lax
from jax.experimental import pallas as pl
from jax.experimental.pallas import tpu as pltpu


def _r8(x):
    return ((x + 7) // 8) * 8


# ---------------------------------------------------------------------------
# Pallas kernel factory (static shapes / offsets closed over).
# ---------------------------------------------------------------------------
def _make_kernel(N, n_xi, l, W, NP, off):
    def kernel(scal_ref, xi_ref, p_ref, y_ref, xi_out_ref):
        # SMEM scalars: [ym, v, D22_0, ..., D22_{N-1}]
        ym = scal_ref[0]
        v = scal_ref[1]
        w = v - ym                               # w_0 = -ym + v

        xiflat = xi_ref[...]                     # (1, W); xim[j] at lanes [j*n_xi, (j+1)*n_xi)

        # ------- hoisted phase: everything that depends only on xim -------
        bd_c1t = p_ref[off['c1t']: off['c1t'] + W, :]    # block-diag C1^T
        bd_fte = p_ref[off['fte']: off['fte'] + W, :]    # block-diag (E^{-1}F)^T
        c2bd = p_ref[off['c2']: off['c2'] + W, :]        # per-REN C2 columns
        base_xi = jnp.dot(xiflat, bd_c1t, preferred_element_type=jnp.float32)  # (1,W) eps-lane layout
        xiF_all = jnp.dot(xiflat, bd_fte, preferred_element_type=jnp.float32)  # (1,W) xi-lane layout
        c2xi = jnp.dot(xiflat, c2bd, preferred_element_type=jnp.float32)       # (1,W) lane j = C2_j xi_j

        lane_w = lax.broadcasted_iota(jnp.int32, (1, W), 1)
        lane_n = lax.broadcasted_iota(jnp.int32, (1, N), 1)
        lane_p = lax.broadcasted_iota(jnp.int32, (1, NP), 1)

        eps_flat = jnp.zeros((1, W), jnp.float32)
        y_acc = jnp.zeros((1, N), jnp.float32)
        w_acc = jnp.zeros((1, NP), jnp.float32)

        # ------- sequential REN cascade: only the w chain lives here -------
        for j in range(N):
            d12_j = p_ref[off['d12'] + j: off['d12'] + j + 1, :]   # (1, W), block j lanes only
            lami_j = p_ref[off['lam'] + j: off['lam'] + j + 1, :]  # 1/Lambda, block j lanes only
            d21_j = p_ref[off['d21'] + j: off['d21'] + j + 1, :]
            d22_j = scal_ref[2 + j]

            w_acc = jnp.where(lane_p == j, w, w_acc)     # input w of REN j (for deferred update)
            base = base_xi + w * d12_j                   # (1, W); block j lanes meaningful

            # eps recursion on the VPU (D11 strictly lower-triangular):
            # eps_i = relu((base_i + acc_i) / Lambda_i); acc += eps_i * D11[:, i]
            acc = jnp.zeros((1, W), jnp.float32)
            for i in range(l):
                gi = j * l + i
                ei = jnp.sum(jnp.where(lane_w == gi,
                                       jnp.maximum((base + acc) * lami_j, 0.0),
                                       0.0))
                eps_flat = jnp.where(lane_w == gi, ei, eps_flat)
                if i + 1 < l:
                    d11_row = p_ref[off['d11'] + gi: off['d11'] + gi + 1, :]
                    acc = acc + ei * d11_row

            # Output (m = 1): u = C2 xi + D21 eps + D22 w  (single reduce on the chain)
            u = (jnp.sum(jnp.where(lane_w == j, c2xi, 0.0) + eps_flat * d21_j)
                 + w * d22_j)

            y_acc = jnp.where(lane_n == j, u, y_acc)
            w = u                                        # feeds the next REN

        # ------- deferred state updates (off the critical chain) -------
        # xi_j+ = (E^{-1}F) xi_j + (E^{-1}B1) eps_j + (E^{-1}B2) w_j, all RENs at once.
        bd_b1te = p_ref[off['b1te']: off['b1te'] + W, :]
        w2xi = p_ref[off['w2x']: off['w2x'] + NP, :]
        xi_next = (xiF_all
                   + jnp.dot(eps_flat, bd_b1te, preferred_element_type=jnp.float32)
                   + jnp.dot(w_acc, w2xi, preferred_element_type=jnp.float32))

        y_ref[...] = y_acc
        xi_out_ref[...] = xi_next

    return kernel


# ---------------------------------------------------------------------------
# Host-side packing: one contiguous f32 parameter buffer (single DMA).
# ---------------------------------------------------------------------------
def pack_ren_params(derived, N, n, m, n_xi, l):
    assert n == 1 and m == 1, "kernel assumes scalar interconnection signals (n = p = 1)"
    Nn, Nl = N * n_xi, N * l
    W = max(Nn, Nl)
    NP = _r8(N)

    off = {}
    r = 0
    for name, rows in (('c1t', W), ('fte', W), ('b1te', W), ('c2', W),
                       ('w2x', NP), ('d12', NP), ('lam', NP), ('d21', NP),
                       ('d11', N * l)):
        off[name] = r
        r += _r8(rows)
    ROWS = _r8(r)

    buf = np.zeros((ROWS, W), np.float64)
    d22 = np.zeros((N,), np.float64)
    for j, d in enumerate(derived):
        C1 = np.asarray(d['C1'], np.float64)       # (l, n_xi)
        D11 = np.asarray(d['D11'], np.float64)     # (l, l) strictly lower-tri
        D12 = np.asarray(d['D12'], np.float64)     # (l, 1)
        Lam = np.asarray(d['Lambda'], np.float64)  # (l,)
        Fm = np.asarray(d['F'], np.float64)        # (n_xi, n_xi)
        B1 = np.asarray(d['B1'], np.float64)       # (n_xi, l)
        B2 = np.asarray(d['B2'], np.float64)       # (n_xi, 1)
        E = np.asarray(d['E'], np.float64)
        C2 = np.asarray(d['C2'], np.float64)       # (1, n_xi)
        D21 = np.asarray(d['D21'], np.float64)     # (1, l)
        Einv = np.linalg.inv(E)                    # E^{-1} folded on the host

        rx, cl = j * n_xi, j * l
        buf[off['c1t'] + rx: off['c1t'] + rx + n_xi, cl:cl + l] = C1.T
        buf[off['fte'] + rx: off['fte'] + rx + n_xi, rx:rx + n_xi] = (Einv @ Fm).T
        buf[off['b1te'] + cl: off['b1te'] + cl + l, rx:rx + n_xi] = (Einv @ B1).T
        buf[off['c2'] + rx: off['c2'] + rx + n_xi, j] = C2[0, :]
        buf[off['w2x'] + j, rx:rx + n_xi] = (Einv @ B2)[:, 0]
        buf[off['d12'] + j, cl:cl + l] = D12[:, 0]
        buf[off['lam'] + j, cl:cl + l] = 1.0 / Lam
        buf[off['d21'] + j, cl:cl + l] = D21[0, :]
        buf[off['d11'] + cl: off['d11'] + cl + l, cl:cl + l] = D11.T
        d22[j] = np.asarray(d['D22'], np.float64)[0, 0]

    meta = dict(N=N, n_xi=n_xi, l=l, W=W, NP=NP, off=off)
    return jnp.asarray(buf, jnp.float32), jnp.asarray(d22, jnp.float32), meta


def three_ren_forward(t, ym, v, xim, packed):
    """Forward pass of ThreeRENL2GershgorinShur.

    t      : unused (signature parity with the torch module)
    ym, v  : scalars; the first REN receives w = -ym + v
    xim    : (N, n_xi) initial states
    packed : output of pack_ren_params
    returns (y (N,), xi (N, n_xi))
    """
    del t
    pbig, d22, meta = packed
    N, n_xi, l = meta['N'], meta['n_xi'], meta['l']
    W, NP, off = meta['W'], meta['NP'], meta['off']
    Nn = N * n_xi

    xi_flat = jnp.zeros((1, W), jnp.float32)
    xi_flat = xi_flat.at[0, :Nn].set(jnp.reshape(xim, (-1,)).astype(jnp.float32))
    scalars = jnp.concatenate([
        jnp.reshape(ym, (1,)).astype(jnp.float32),
        jnp.reshape(v, (1,)).astype(jnp.float32),
        d22,
    ])

    kernel = _make_kernel(N, n_xi, l, W, NP, off)
    y2, xi2 = pl.pallas_call(
        kernel,
        out_shape=(jax.ShapeDtypeStruct((1, N), jnp.float32),
                   jax.ShapeDtypeStruct((1, W), jnp.float32)),
        in_specs=[
            pl.BlockSpec(memory_space=pltpu.MemorySpace.SMEM),   # [ym, v, D22_j...]
            pl.BlockSpec(memory_space=pltpu.MemorySpace.VMEM),   # flattened initial states
            pl.BlockSpec(memory_space=pltpu.MemorySpace.VMEM),   # packed parameter buffer
        ],
        out_specs=(
            pl.BlockSpec(memory_space=pltpu.MemorySpace.VMEM),
            pl.BlockSpec(memory_space=pltpu.MemorySpace.VMEM),
        ),
    )(scalars, xi_flat, pbig)

    return y2[0], xi2[0, :Nn].reshape(N, n_xi)


# ---------------------------------------------------------------------------
# Host-side parameter derivation (RENRG.set_model_param /
# ThreeRENL2GershgorinShur.set_model_param) — construction-time, plain JAX.
# ---------------------------------------------------------------------------
def renrg_set_model_param(gamma, X, Y, B2, C2, D21, X3, Y3, D12,
                          n, m, n_xi, l, eps=1e-3):
    s = max(n, m)
    I_s = jnp.eye(s, dtype=jnp.float32)
    R = gamma * jnp.eye(n, dtype=jnp.float32)
    Q = (-1.0 / gamma) * jnp.eye(m, dtype=jnp.float32)
    M_ = X3 @ X3.T + Y3 - Y3.T + eps * I_s
    M_tilde = (I_s - M_) @ jnp.linalg.inv(I_s + M_)
    Zeta = M_tilde[:m, :n]
    D22 = gamma * Zeta
    R_cap = R - (1.0 / gamma) * (D22.T @ D22)
    C2_cap = D22.T @ Q @ C2
    D21_cap = D22.T @ Q @ D21 - D12.T
    vec_R = jnp.concatenate([C2_cap.T, D21_cap.T, B2], axis=0)
    vec_Q = jnp.concatenate([C2.T, D21.T,
                             jnp.zeros((n_xi, m), jnp.float32)], axis=0)
    H = (X.T @ X + eps * jnp.eye(2 * n_xi + l, dtype=jnp.float32)
         + vec_R @ jnp.linalg.inv(R_cap) @ vec_R.T
         - vec_Q @ Q @ vec_Q.T)
    H11 = H[:n_xi, :n_xi]
    H21 = H[n_xi:n_xi + l, :n_xi]
    H22 = H[n_xi:n_xi + l, n_xi:n_xi + l]
    H31 = H[n_xi + l:, :n_xi]
    H32 = H[n_xi + l:, n_xi:n_xi + l]
    H33 = H[n_xi + l:, n_xi + l:]
    return dict(
        F=H31, B1=H32, E=0.5 * (H11 + H33 + Y - Y.T),
        Lambda=jnp.diag(H22), D11=-jnp.tril(H22, k=-1), C1=-H21,
        D22=D22, B2=B2, C2=C2, D21=D21, D12=D12,
    )


# ---------------------------------------------------------------------------
# Pure-JAX reference (direct port of the torch forward) for validation.
# ---------------------------------------------------------------------------
def _renrg_forward_ref(w, xi, d):
    l = d['Lambda'].shape[0]
    eps = jnp.zeros((l,), jnp.float32)
    for i in range(l):
        vi = d['C1'][i] @ xi + d['D11'][i] @ eps + d['D12'][i] @ w
        eps = eps.at[i].set(jnp.maximum(vi / d['Lambda'][i], 0.0))
    e_xi = d['F'] @ xi + d['B1'] @ eps + d['B2'] @ w
    xi_next = jnp.linalg.inv(d['E']) @ e_xi
    u = d['C2'] @ xi + d['D21'] @ eps + d['D22'] @ w
    return u, xi_next


def three_ren_ref(ym, v, xim, derived):
    w = jnp.reshape(v - ym, (1,)).astype(jnp.float32)
    ys, xis = [], []
    for j in range(len(derived)):
        u, xi_next = _renrg_forward_ref(w, xim[j], derived[j])
        ys.append(u[0])
        xis.append(xi_next)
        w = u
    return jnp.stack(ys), jnp.stack(xis)


if __name__ == "__main__":
    key = jax.random.PRNGKey(0)

    # N cascaded RENs with scalar interconnection (n = p = 1), state n_xi, l units.
    N, n, p, n_xi, l = 3, 1, 1, 8, 8
    s = max(n, p)

    keys = jax.random.split(key, 4 + 8 * N)
    kM, ky, kz, kin = keys[0], keys[1], keys[2], keys[3]
    M_mat = jax.random.normal(kM, (N, N), dtype=jnp.float32)
    y_par = jax.random.normal(ky, (N,), dtype=jnp.float32)
    z_par = jax.random.normal(kz, (N,), dtype=jnp.float32)

    # Gershgorin-Shur gamma assignment (ThreeRENL2GershgorinShur.set_model_param).
    pv = jnp.sum(jnp.abs(M_mat), axis=0) + jnp.abs(y_par)
    xg = jnp.sum(jnp.abs(M_mat), axis=1) + jnp.abs(z_par)
    gammas = jnp.sqrt(1.0 / (xg * pv))

    derived = []
    for j in range(N):
        kj = keys[4 + 8 * j: 4 + 8 * (j + 1)]
        X = jax.random.normal(kj[0], (2 * n_xi + l, 2 * n_xi + l), jnp.float32)
        Y = jax.random.normal(kj[1], (n_xi, n_xi), jnp.float32)
        B2 = jax.random.normal(kj[2], (n_xi, n), jnp.float32)
        C2 = jax.random.normal(kj[3], (p, n_xi), jnp.float32)
        D21 = jax.random.normal(kj[4], (p, l), jnp.float32)
        X3 = jax.random.normal(kj[5], (s, s), jnp.float32)
        Y3 = jax.random.normal(kj[6], (s, s), jnp.float32)
        D12 = jax.random.normal(kj[7], (l, n), jnp.float32)
        derived.append(renrg_set_model_param(
            gammas[j], X, Y, B2, C2, D21, X3, Y3, D12, n, p, n_xi, l))

    packed = pack_ren_params(derived, N, n, p, n_xi, l)

    # Forward inputs: t (unused), scalar ym, scalar v, N initial states.
    kym, kv, kxi = jax.random.split(kin, 3)
    ym = jax.random.normal(kym, (), dtype=jnp.float32)
    v = jax.random.normal(kv, (), dtype=jnp.float32)
    xim = jax.random.normal(kxi, (N, n_xi), dtype=jnp.float32)
    t = 0.0  # unused, signature parity

    y_out, xi_out = three_ren_forward(t, ym, v, xim, packed)
    y_out = jax.block_until_ready(y_out)
    xi_out = jax.block_until_ready(xi_out)

    # Validate against a direct pure-JAX port of the torch forward.
    y_ref, xi_ref = three_ren_ref(ym, v, xim, derived)

    assert y_out.shape == (N,) and xi_out.shape == (N, n_xi)
    assert bool(jnp.all(jnp.isfinite(y_out))) and bool(jnp.all(jnp.isfinite(xi_out)))
    err_y = float(jnp.max(jnp.abs(y_out - y_ref) / (1.0 + jnp.abs(y_ref))))
    err_x = float(jnp.max(jnp.abs(xi_out - xi_ref) / (1.0 + jnp.abs(xi_ref))))
    assert err_y < 1e-3 and err_x < 1e-3, (err_y, err_x)

    # TODO(synk): torch.inverse / E.inverse() and the full set_model_param
    # derivation are construction-time parameter setup; they run on the host
    # (NumPy/JAX), not inside the Pallas kernel.
    print("KERNEL_OK")
</pallas_src>

<mosaic_0001>
module attributes {stable_mosaic.version = 11 : i64} {
  func.func @kernel(%arg0: memref<5xf32, #tpu.memory_space<smem>>, %arg1: memref<1x24xf32, #tpu.memory_space<vmem>>, %arg2: memref<152x24xf32, #tpu.memory_space<vmem>>, %arg3: memref<1x3xf32, #tpu.memory_space<vmem>>, %arg4: memref<1x24xf32, #tpu.memory_space<vmem>>) attributes {dimension_semantics = [], scalar_prefetch = 0 : i64, scratch_operands = 0 : i64, tpu.core_type = #tpu.core_type<tc>} {
    %c0 = arith.constant 0 : index
    %0 = memref.load %arg0[%c0] : memref<5xf32, #tpu.memory_space<smem>>
    %c1 = arith.constant 1 : index
    %1 = memref.load %arg0[%c1] : memref<5xf32, #tpu.memory_space<smem>>
    %2 = arith.subf %1, %0 : f32
    %c0_0 = arith.constant 0 : index
    %c0_1 = arith.constant 0 : index
    %3 = vector.load %arg1[%c0_0, %c0_1] : memref<1x24xf32, #tpu.memory_space<vmem>>, vector<1x24xf32>
    %c0_2 = arith.constant 0 : index
    %c0_3 = arith.constant 0 : index
    %4 = vector.load %arg2[%c0_2, %c0_3] : memref<152x24xf32, #tpu.memory_space<vmem>>, vector<24x24xf32>
    %c24 = arith.constant 24 : index
    %c0_4 = arith.constant 0 : index
    %5 = vector.load %arg2[%c24, %c0_4] : memref<152x24xf32, #tpu.memory_space<vmem>>, vector<24x24xf32>
    %c72 = arith.constant 72 : index
    %c0_5 = arith.constant 0 : index
    %6 = vector.load %arg2[%c72, %c0_5] : memref<152x24xf32, #tpu.memory_space<vmem>>, vector<24x24xf32>
    %cst = arith.constant dense<0.000000e+00> : vector<1x24xf32>
    %7 = tpu.matmul %3, %4, %cst {dimension_numbers = #tpu.dot_dimension_numbers<[1], [0], [0], [1], [0, 0, 1, 1], [], []>} : vector<1x24xf32>, vector<24x24xf32>, vector<1x24xf32> -> vector<1x24xf32>
    %cst_6 = arith.constant dense<0.000000e+00> : vector<1x24xf32>
    %8 = tpu.matmul %3, %5, %cst_6 {dimension_numbers = #tpu.dot_dimension_numbers<[1], [0], [0], [1], [0, 0, 1, 1], [], []>} : vector<1x24xf32>, vector<24x24xf32>, vector<1x24xf32> -> vector<1x24xf32>
    %cst_7 = arith.constant dense<0.000000e+00> : vector<1x24xf32>
    %9 = tpu.matmul %3, %6, %cst_7 {dimension_numbers = #tpu.dot_dimension_numbers<[1], [0], [0], [1], [0, 0, 1, 1], [], []>} : vector<1x24xf32>, vector<24x24xf32>, vector<1x24xf32> -> vector<1x24xf32>
    %10 = tpu.iota {dimensions = array<i32: 1>} : vector<1x24xi32>
    %11 = tpu.iota {dimensions = array<i32: 1>} : vector<1x3xi32>
    %12 = tpu.iota {dimensions = array<i32: 1>} : vector<1x8xi32>
    %cst_8 = arith.constant 0.000000e+00 : f32
    %13 = vector.broadcast %cst_8 : f32 to vector<1x24xf32>
    %cst_9 = arith.constant 0.000000e+00 : f32
    %14 = vector.broadcast %cst_9 : f32 to vector<1x3xf32>
    %cst_10 = arith.constant 0.000000e+00 : f32
    %15 = vector.broadcast %cst_10 : f32 to vector<1x8xf32>
    %c104 = arith.constant 104 : index
    %c0_11 = arith.constant 0 : index
    %16 = vector.load %arg2[%c104, %c0_11] : memref<152x24xf32, #tpu.memory_space<vmem>>, vector<1x24xf32>
    %c112 = arith.constant 112 : index
    %c0_12 = arith.constant 0 : index
    %17 = vector.load %arg2[%c112, %c0_12] : memref<152x24xf32, #tpu.memory_space<vmem>>, vector<1x24xf32>
    %c120 = arith.constant 120 : index
    %c0_13 = arith.constant 0 : index
    %18 = vector.load %arg2[%c120, %c0_13] : memref<152x24xf32, #tpu.memory_space<vmem>>, vector<1x24xf32>
    %c2 = arith.constant 2 : index
    %19 = memref.load %arg0[%c2] : memref<5xf32, #tpu.memory_space<smem>>
    %c0_i32 = arith.constant 0 : i32
    %20 = vector.broadcast %c0_i32 : i32 to vector<1x8xi32>
    %21 = arith.cmpi eq, %12, %20 : vector<1x8xi32>
    %22 = vector.broadcast %2 : f32 to vector<1x8xf32>
    %23 = arith.select %21, %22, %15 : vector<1x8xi1>, vector<1x8xf32>
    %24 = vector.broadcast %2 : f32 to vector<1x24xf32>
    %25 = arith.mulf %24, %16 : vector<1x24xf32>
    %26 = arith.addf %7, %25 : vector<1x24xf32>
    %cst_14 = arith.constant 0.000000e+00 : f32
    %27 = vector.broadcast %cst_14 : f32 to vector<1x24xf32>
    %c0_i32_15 = arith.constant 0 : i32
    %28 = vector.broadcast %c0_i32_15 : i32 to vector<1x24xi32>
    %29 = arith.cmpi eq, %10, %28 : vector<1x24xi32>
    %30 = arith.addf %26, %27 : vector<1x24xf32>
    %31 = arith.mulf %30, %17 : vector<1x24xf32>
    %cst_16 = arith.constant 0.000000e+00 : f32
    %32 = vector.broadcast %cst_16 : f32 to vector<1x24xf32>
    %33 = arith.maximumf %31, %32 : vector<1x24xf32>
    %cst_17 = arith.constant 0.000000e+00 : f32
    %34 = vector.broadcast %cst_17 : f32 to vector<1x24xf32>
    %35 = arith.select %29, %33, %34 : vector<1x24xi1>, vector<1x24xf32>
    %36 = vector.shape_cast %35 : vector<1x24xf32> to vector<1x1x24xf32>
    %cst_18 = arith.constant dense<0.000000e+00> : vector<1xf32>
    %37 = vector.multi_reduction <add>, %36, %cst_18 [1, 2] : vector<1x1x24xf32> to vector<1xf32>
    %38 = vector.shape_cast %37 : vector<1xf32> to vector<1x1x1xf32>
    %39 = vector.extract %38[0, 0, 0] : f32 from vector<1x1x1xf32>
    %c0_i32_19 = arith.constant 0 : i32
    %40 = vector.broadcast %c0_i32_19 : i32 to vector<1x24xi32>
    %41 = arith.cmpi eq, %10, %40 : vector<1x24xi32>
    %42 = vector.broadcast %39 : f32 to vector<1x24xf32>
    %43 = arith.select %41, %42, %13 : vector<1x24xi1>, vector<1x24xf32>
    %c128 = arith.constant 128 : index
    %c0_20 = arith.constant 0 : index
    %44 = vector.load %arg2[%c128, %c0_20] : memref<152x24xf32, #tpu.memory_space<vmem>>, vector<1x24xf32>
    %45 = vector.broadcast %39 : f32 to vector<1x24xf32>
    %46 = arith.mulf %45, %44 : vector<1x24xf32>
    %47 = arith.addf %27, %46 : vector<1x24xf32>
    %c1_i32 = arith.constant 1 : i32
    %48 = vector.broadcast %c1_i32 : i32 to vector<1x24xi32>
    %49 = arith.cmpi eq, %10, %48 : vector<1x24xi32>
    %50 = arith.addf %26, %47 : vector<1x24xf32>
    %51 = arith.mulf %50, %17 : vector<1x24xf32>
    %cst_21 = arith.constant 0.000000e+00 : f32
    %52 = vector.broadcast %cst_21 : f32 to vector<1x24xf32>
    %53 = arith.maximumf %51, %52 : vector<1x24xf32>
    %cst_22 = arith.constant 0.000000e+00 : f32
    %54 = vector.broadcast %cst_22 : f32 to vector<1x24xf32>
    %55 = arith.select %49, %53, %54 : vector<1x24xi1>, vector<1x24xf32>
    %56 = vector.shape_cast %55 : vector<1x24xf32> to vector<1x1x24xf32>
    %cst_23 = arith.constant dense<0.000000e+00> : vector<1xf32>
    %57 = vector.multi_reduction <add>, %56, %cst_23 [1, 2] : vector<1x1x24xf32> to vector<1xf32>
    %58 = vector.shape_cast %57 : vector<1xf32> to vector<1x1x1xf32>
    %59 = vector.extract %58[0, 0, 0] : f32 from vector<1x1x1xf32>
    %c1_i32_24 = arith.constant 1 : i32
    %60 = vector.broadcast %c1_i32_24 : i32 to vector<1x24xi32>
    %61 = arith.cmpi eq, %10, %60 : vector<1x24xi32>
    %62 = vector.broadcast %59 : f32 to vector<1x24xf32>
    %63 = arith.select %61, %62, %43 : vector<1x24xi1>, vector<1x24xf32>
    %c129 = arith.constant 129 : index
    %c0_25 = arith.constant 0 : index
    %64 = vector.load %arg2[%c129, %c0_25] : memref<152x24xf32, #tpu.memory_space<vmem>>, vector<1x24xf32>
    %65 = vector.broadcast %59 : f32 to vector<1x24xf32>
    %66 = arith.mulf %65, %64 : vector<1x24xf32>
    %67 = arith.addf %47, %66 : vector<1x24xf32>
    %c2_i32 = arith.constant 2 : i32
    %68 = vector.broadcast %c2_i32 : i32 to vector<1x24xi32>
    %69 = arith.cmpi eq, %10, %68 : vector<1x24xi32>
    %70 = arith.addf %26, %67 : vector<1x24xf32>
    %71 = arith.mulf %70, %17 : vector<1x24xf32>
    %cst_26 = arith.constant 0.000000e+00 : f32
    %72 = vector.broadcast %cst_26 : f32 to vector<1x24xf32>
    %73 = arith.maximumf %71, %72 : vector<1x24xf32>
    %cst_27 = arith.constant 0.000000e+00 : f32
    %74 = vector.broadcast %cst_27 : f32 to vector<1x24xf32>
    %75 = arith.select %69, %73, %74 : vector<1x24xi1>, vector<1x24xf32>
    %76 = vector.shape_cast %75 : vector<1x24xf32> to vector<1x1x24xf32>
    %cst_28 = arith.constant dense<0.000000e+00> : vector<1xf32>
    %77 = vector.multi_reduction <add>, %76, %cst_28 [1, 2] : vector<1x1x24xf32> to vector<1xf32>
    %78 = vector.shape_cast %77 : vector<1xf32> to vector<1x1x1xf32>
    %79 = vector.extract %78[0, 0, 0] : f32 from vector<1x1x1xf32>
    %c2_i32_29 = arith.constant 2 : i32
    %80 = vector.broadcast %c2_i32_29 : i32 to vector<1x24xi32>
    %81 = arith.cmpi eq, %10, %80 : vector<1x24xi32>
    %82 = vector.broadcast %79 : f32 to vector<1x24xf32>
    %83 = arith.select %81, %82, %63 : vector<1x24xi1>, vector<1x24xf32>
    %c130 = arith.constant 130 : index
    %c0_30 = arith.constant 0 : index
    %84 = vector.load %arg2[%c130, %c0_30] : memref<152x24xf32, #tpu.memory_space<vmem>>, vector<1x24xf32>
    %85 = vector.broadcast %79 : f32 to vector<1x24xf32>
    %86 = arith.mulf %85, %84 : vector<1x24xf32>
    %87 = arith.addf %67, %86 : vector<1x24xf32>
    %c3_i32 = arith.constant 3 : i32
    %88 = vector.broadcast %c3_i32 : i32 to vector<1x24xi32>
    %89 = arith.cmpi eq, %10, %88 : vector<1x24xi32>
    %90 = arith.addf %26, %87 : vector<1x24xf32>
    %91 = arith.mulf %90, %17 : vector<1x24xf32>
    %cst_31 = arith.constant 0.000000e+00 : f32
    %92 = vector.broadcast %cst_31 : f32 to vector<1x24xf32>
    %93 = arith.maximumf %91, %92 : vector<1x24xf32>
    %cst_32 = arith.constant 0.000000e+00 : f32
    %94 = vector.broadcast %cst_32 : f32 to vector<1x24xf32>
    %95 = arith.select %89, %93, %94 : vector<1x24xi1>, vector<1x24xf32>
    %96 = vector.shape_cast %95 : vector<1x24xf32> to vector<1x1x24xf32>
    %cst_33 = arith.constant dense<0.000000e+00> : vector<1xf32>
    %97 = vector.multi_reduction <add>, %96, %cst_33 [1, 2] : vector<1x1x24xf32> to vector<1xf32>
    %98 = vector.shape_cast %97 : vector<1xf32> to vector<1x1x1xf32>
    %99 = vector.extract %98[0, 0, 0] : f32 from vector<1x1x1xf32>
    %c3_i32_34 = arith.constant 3 : i32
    %100 = vector.broadcast %c3_i32_34 : i32 to vector<1x24xi32>
    %101 = arith.cmpi eq, %10, %100 : vector<1x24xi32>
    %102 = vector.broadcast %99 : f32 to vector<1x24xf32>
    %103 = arith.select %101, %102, %83 : vector<1x24xi1>, vector<1x24xf32>
    %c131 = arith.constant 131 : index
    %c0_35 = arith.constant 0 : index
    %104 = vector.load %arg2[%c131, %c0_35] : memref<152x24xf32, #tpu.memory_space<vmem>>, vector<1x24xf32>
    %105 = vector.broadcast %99 : f32 to vector<1x24xf32>
    %106 = arith.mulf %105, %104 : vector<1x24xf32>
    %107 = arith.addf %87, %106 : vector<1x24xf32>
    %c4_i32 = arith.constant 4 : i32
    %108 = vector.broadcast %c4_i32 : i32 to vector<1x24xi32>
    %109 = arith.cmpi eq, %10, %108 : vector<1x24xi32>
    %110 = arith.addf %26, %107 : vector<1x24xf32>
    %111 = arith.mulf %110, %17 : vector<1x24xf32>
    %cst_36 = arith.constant 0.000000e+00 : f32
    %112 = vector.broadcast %cst_36 : f32 to vector<1x24xf32>
    %113 = arith.maximumf %111, %112 : vector<1x24xf32>
    %cst_37 = arith.constant 0.000000e+00 : f32
    %114 = vector.broadcast %cst_37 : f32 to vector<1x24xf32>
    %115 = arith.select %109, %113, %114 : vector<1x24xi1>, vector<1x24xf32>
    %116 = vector.shape_cast %115 : vector<1x24xf32> to vector<1x1x24xf32>
    %cst_38 = arith.constant dense<0.000000e+00> : vector<1xf32>
    %117 = vector.multi_reduction <add>, %116, %cst_38 [1, 2] : vector<1x1x24xf32> to vector<1xf32>
    %118 = vector.shape_cast %117 : vector<1xf32> to vector<1x1x1xf32>
    %119 = vector.extract %118[0, 0, 0] : f32 from vector<1x1x1xf32>
    %c4_i32_39 = arith.constant 4 : i32
    %120 = vector.broadcast %c4_i32_39 : i32 to vector<1x24xi32>
    %121 = arith.cmpi eq, %10, %120 : vector<1x24xi32>
    %122 = vector.broadcast %119 : f32 to vector<1x24xf32>
    %123 = arith.select %121, %122, %103 : vector<1x24xi1>, vector<1x24xf32>
    %c132 = arith.constant 132 : index
    %c0_40 = arith.constant 0 : index
    %124 = vector.load %arg2[%c132, %c0_40] : memref<152x24xf32, #tpu.memory_space<vmem>>, vector<1x24xf32>
    %125 = vector.broadcast %119 : f32 to vector<1x24xf32>
    %126 = arith.mulf %125, %124 : vector<1x24xf32>
    %127 = arith.addf %107, %126 : vector<1x24xf32>
    %c5_i32 = arith.constant 5 : i32
    %128 = vector.broadcast %c5_i32 : i32 to vector<1x24xi32>
    %129 = arith.cmpi eq, %10, %128 : vector<1x24xi32>
    %130 = arith.addf %26, %127 : vector<1x24xf32>
    %131 = arith.mulf %130, %17 : vector<1x24xf32>
    %cst_41 = arith.constant 0.000000e+00 : f32
    %132 = vector.broadcast %cst_41 : f32 to vector<1x24xf32>
    %133 = arith.maximumf %131, %132 : vector<1x24xf32>
    %cst_42 = arith.constant 0.000000e+00 : f32
    %134 = vector.broadcast %cst_42 : f32 to vector<1x24xf32>
    %135 = arith.select %129, %133, %134 : vector<1x24xi1>, vector<1x24xf32>
    %136 = vector.shape_cast %135 : vector<1x24xf32> to vector<1x1x24xf32>
    %cst_43 = arith.constant dense<0.000000e+00> : vector<1xf32>
    %137 = vector.multi_reduction <add>, %136, %cst_43 [1, 2] : vector<1x1x24xf32> to vector<1xf32>
    %138 = vector.shape_cast %137 : vector<1xf32> to vector<1x1x1xf32>
    %139 = vector.extract %138[0, 0, 0] : f32 from vector<1x1x1xf32>
    %c5_i32_44 = arith.constant 5 : i32
    %140 = vector.broadcast %c5_i32_44 : i32 to vector<1x24xi32>
    %141 = arith.cmpi eq, %10, %140 : vector<1x24xi32>
    %142 = vector.broadcast %139 : f32 to vector<1x24xf32>
    %143 = arith.select %141, %142, %123 : vector<1x24xi1>, vector<1x24xf32>
    %c133 = arith.constant 133 : index
    %c0_45 = arith.constant 0 : index
    %144 = vector.load %arg2[%c133, %c0_45] : memref<152x24xf32, #tpu.memory_space<vmem>>, vector<1x24xf32>
    %145 = vector.broadcast %139 : f32 to vector<1x24xf32>
    %146 = arith.mulf %145, %144 : vector<1x24xf32>
    %147 = arith.addf %127, %146 : vector<1x24xf32>
    %c6_i32 = arith.constant 6 : i32
    %148 = vector.broadcast %c6_i32 : i32 to vector<1x24xi32>
    %149 = arith.cmpi eq, %10, %148 : vector<1x24xi32>
    %150 = arith.addf %26, %147 : vector<1x24xf32>
    %151 = arith.mulf %150, %17 : vector<1x24xf32>
    %cst_46 = arith.constant 0.000000e+00 : f32
    %152 = vector.broadcast %cst_46 : f32 to vector<1x24xf32>
    %153 = arith.maximumf %151, %152 : vector<1x24xf32>
    %cst_47 = arith.constant 0.000000e+00 : f32
    %154 = vector.broadcast %cst_47 : f32 to vector<1x24xf32>
    %155 = arith.select %149, %153, %154 : vector<1x24xi1>, vector<1x24xf32>
    %156 = vector.shape_cast %155 : vector<1x24xf32> to vector<1x1x24xf32>
    %cst_48 = arith.constant dense<0.000000e+00> : vector<1xf32>
    %157 = vector.multi_reduction <add>, %156, %cst_48 [1, 2] : vector<1x1x24xf32> to vector<1xf32>
    %158 = vector.shape_cast %157 : vector<1xf32> to vector<1x1x1xf32>
    %159 = vector.extract %158[0, 0, 0] : f32 from vector<1x1x1xf32>
    %c6_i32_49 = arith.constant 6 : i32
    %160 = vector.broadcast %c6_i32_49 : i32 to vector<1x24xi32>
    %161 = arith.cmpi eq, %10, %160 : vector<1x24xi32>
    %162 = vector.broadcast %159 : f32 to vector<1x24xf32>
    %163 = arith.select %161, %162, %143 : vector<1x24xi1>, vector<1x24xf32>
    %c134 = arith.constant 134 : index
    %c0_50 = arith.constant 0 : index
    %164 = vector.load %arg2[%c134, %c0_50] : memref<152x24xf32, #tpu.memory_space<vmem>>, vector<1x24xf32>
    %165 = vector.broadcast %159 : f32 to vector<1x24xf32>
    %166 = arith.mulf %165, %164 : vector<1x24xf32>
    %167 = arith.addf %147, %166 : vector<1x24xf32>
    %c7_i32 = arith.constant 7 : i32
    %168 = vector.broadcast %c7_i32 : i32 to vector<1x24xi32>
    %169 = arith.cmpi eq, %10, %168 : vector<1x24xi32>
    %170 = arith.addf %26, %167 : vector<1x24xf32>
    %171 = arith.mulf %170, %17 : vector<1x24xf32>
    %cst_51 = arith.constant 0.000000e+00 : f32
    %172 = vector.broadcast %cst_51 : f32 to vector<1x24xf32>
    %173 = arith.maximumf %171, %172 : vector<1x24xf32>
    %cst_52 = arith.constant 0.000000e+00 : f32
    %174 = vector.broadcast %cst_52 : f32 to vector<1x24xf32>
    %175 = arith.select %169, %173, %174 : vector<1x24xi1>, vector<1x24xf32>
    %176 = vector.shape_cast %175 : vector<1x24xf32> to vector<1x1x24xf32>
    %cst_53 = arith.constant dense<0.000000e+00> : vector<1xf32>
    %177 = vector.multi_reduction <add>, %176, %cst_53 [1, 2] : vector<1x1x24xf32> to vector<1xf32>
    %178 = vector.shape_cast %177 : vector<1xf32> to vector<1x1x1xf32>
    %179 = vector.extract %178[0, 0, 0] : f32 from vector<1x1x1xf32>
    %c7_i32_54 = arith.constant 7 : i32
    %180 = vector.broadcast %c7_i32_54 : i32 to vector<1x24xi32>
    %181 = arith.cmpi eq, %10, %180 : vector<1x24xi32>
    %182 = vector.broadcast %179 : f32 to vector<1x24xf32>
    %183 = arith.select %181, %182, %163 : vector<1x24xi1>, vector<1x24xf32>
    %c0_i32_55 = arith.constant 0 : i32
    %184 = vector.broadcast %c0_i32_55 : i32 to vector<1x24xi32>
    %185 = arith.cmpi eq, %10, %184 : vector<1x24xi32>
    %cst_56 = arith.constant 0.000000e+00 : f32
    %186 = vector.broadcast %cst_56 : f32 to vector<1x24xf32>
    %187 = arith.select %185, %9, %186 : vector<1x24xi1>, vector<1x24xf32>
    %188 = arith.mulf %183, %18 : vector<1x24xf32>
    %189 = arith.addf %187, %188 : vector<1x24xf32>
    %190 = vector.shape_cast %189 : vector<1x24xf32> to vector<1x1x24xf32>
    %cst_57 = arith.constant dense<0.000000e+00> : vector<1xf32>
    %191 = vector.multi_reduction <add>, %190, %cst_57 [1, 2] : vector<1x1x24xf32> to vector<1xf32>
    %192 = vector.shape_cast %191 : vector<1xf32> to vector<1x1x1xf32>
    %193 = vector.extract %192[0, 0, 0] : f32 from vector<1x1x1xf32>
    %194 = arith.mulf %2, %19 : f32
    %195 = arith.addf %193, %194 : f32
    %c0_i32_58 = arith.constant 0 : i32
    %196 = vector.broadcast %c0_i32_58 : i32 to vector<1x3xi32>
    %197 = arith.cmpi eq, %11, %196 : vector<1x3xi32>
    %198 = vector.broadcast %195 : f32 to vector<1x3xf32>
    %199 = arith.select %197, %198, %14 : vector<1x3xi1>, vector<1x3xf32>
    %c105 = arith.constant 105 : index
    %c0_59 = arith.constant 0 : index
    %200 = vector.load %arg2[%c105, %c0_59] : memref<152x24xf32, #tpu.memory_space<vmem>>, vector<1x24xf32>
    %c113 = arith.constant 113 : index
    %c0_60 = arith.constant 0 : index
    %201 = vector.load %arg2[%c113, %c0_60] : memref<152x24xf32, #tpu.memory_space<vmem>>, vector<1x24xf32>
    %c121 = arith.constant 121 : index
    %c0_61 = arith.constant 0 : index
    %202 = vector.load %arg2[%c121, %c0_61] : memref<152x24xf32, #tpu.memory_space<vmem>>, vector<1x24xf32>
    %c3 = arith.constant 3 : index
    %203 = memref.load %arg0[%c3] : memref<5xf32, #tpu.memory_space<smem>>
    %c1_i32_62 = arith.constant 1 : i32
    %204 = vector.broadcast %c1_i32_62 : i32 to vector<1x8xi32>
    %205 = arith.cmpi eq, %12, %204 : vector<1x8xi32>
    %206 = vector.broadcast %195 : f32 to vector<1x8xf32>
    %207 = arith.select %205, %206, %23 : vector<1x8xi1>, vector<1x8xf32>
    %208 = vector.broadcast %195 : f32 to vector<1x24xf32>
    %209 = arith.mulf %208, %200 : vector<1x24xf32>
    %210 = arith.addf %7, %209 : vector<1x24xf32>
    %cst_63 = arith.constant 0.000000e+00 : f32
    %211 = vector.broadcast %cst_63 : f32 to vector<1x24xf32>
    %c8_i32 = arith.constant 8 : i32
    %212 = vector.broadcast %c8_i32 : i32 to vector<1x24xi32>
    %213 = arith.cmpi eq, %10, %212 : vector<1x24xi32>
    %214 = arith.addf %210, %211 : vector<1x24xf32>
    %215 = arith.mulf %214, %201 : vector<1x24xf32>
    %cst_64 = arith.constant 0.000000e+00 : f32
    %216 = vector.broadcast %cst_64 : f32 to vector<1x24xf32>
    %217 = arith.maximumf %215, %216 : vector<1x24xf32>
    %cst_65 = arith.constant 0.000000e+00 : f32
    %218 = vector.broadcast %cst_65 : f32 to vector<1x24xf32>
    %219 = arith.select %213, %217, %218 : vector<1x24xi1>, vector<1x24xf32>
    %220 = vector.shape_cast %219 : vector<1x24xf32> to vector<1x1x24xf32>
    %cst_66 = arith.constant dense<0.000000e+00> : vector<1xf32>
    %221 = vector.multi_reduction <add>, %220, %cst_66 [1, 2] : vector<1x1x24xf32> to vector<1xf32>
    %222 = vector.shape_cast %221 : vector<1xf32> to vector<1x1x1xf32>
    %223 = vector.extract %222[0, 0, 0] : f32 from vector<1x1x1xf32>
    %c8_i32_67 = arith.constant 8 : i32
    %224 = vector.broadcast %c8_i32_67 : i32 to vector<1x24xi32>
    %225 = arith.cmpi eq, %10, %224 : vector<1x24xi32>
    %226 = vector.broadcast %223 : f32 to vector<1x24xf32>
    %227 = arith.select %225, %226, %183 : vector<1x24xi1>, vector<1x24xf32>
    %c136 = arith.constant 136 : index
    %c0_68 = arith.constant 0 : index
    %228 = vector.load %arg2[%c136, %c0_68] : memref<152x24xf32, #tpu.memory_space<vmem>>, vector<1x24xf32>
    %229 = vector.broadcast %223 : f32 to vector<1x24xf32>
    %230 = arith.mulf %229, %228 : vector<1x24xf32>
    %231 = arith.addf %211, %230 : vector<1x24xf32>
    %c9_i32 = arith.constant 9 : i32
    %232 = vector.broadcast %c9_i32 : i32 to vector<1x24xi32>
    %233 = arith.cmpi eq, %10, %232 : vector<1x24xi32>
    %234 = arith.addf %210, %231 : vector<1x24xf32>
    %235 = arith.mulf %234, %201 : vector<1x24xf32>
    %cst_69 = arith.constant 0.000000e+00 : f32
    %236 = vector.broadcast %cst_69 : f32 to vector<1x24xf32>
    %237 = arith.maximumf %235, %236 : vector<1x24xf32>
    %cst_70 = arith.constant 0.000000e+00 : f32
    %238 = vector.broadcast %cst_70 : f32 to vector<1x24xf32>
    %239 = arith.select %233, %237, %238 : vector<1x24xi1>, vector<1x24xf32>
    %240 = vector.shape_cast %239 : vector<1x24xf32> to vector<1x1x24xf32>
    %cst_71 = arith.constant dense<0.000000e+00> : vector<1xf32>
    %241 = vector.multi_reduction <add>, %240, %cst_71 [1, 2] : vector<1x1x24xf32> to vector<1xf32>
    %242 = vector.shape_cast %241 : vector<1xf32> to vector<1x1x1xf32>
    %243 = vector.extract %242[0, 0, 0] : f32 from vector<1x1x1xf32>
    %c9_i32_72 = arith.constant 9 : i32
    %244 = vector.broadcast %c9_i32_72 : i32 to vector<1x24xi32>
    %245 = arith.cmpi eq, %10, %244 : vector<1x24xi32>
    %246 = vector.broadcast %243 : f32 to vector<1x24xf32>
    %247 = arith.select %245, %246, %227 : vector<1x24xi1>, vector<1x24xf32>
    %c137 = arith.constant 137 : index
    %c0_73 = arith.constant 0 : index
    %248 = vector.load %arg2[%c137, %c0_73] : memref<152x24xf32, #tpu.memory_space<vmem>>, vector<1x24xf32>
    %249 = vector.broadcast %243 : f32 to vector<1x24xf32>
    %250 = arith.mulf %249, %248 : vector<1x24xf32>
    %251 = arith.addf %231, %250 : vector<1x24xf32>
    %c10_i32 = arith.constant 10 : i32
    %252 = vector.broadcast %c10_i32 : i32 to vector<1x24xi32>
    %253 = arith.cmpi eq, %10, %252 : vector<1x24xi32>
    %254 = arith.addf %210, %251 : vector<1x24xf32>
    %255 = arith.mulf %254, %201 : vector<1x24xf32>
    %cst_74 = arith.constant 0.000000e+00 : f32
    %256 = vector.broadcast %cst_74 : f32 to vector<1x24xf32>
    %257 = arith.maximumf %255, %256 : vector<1x24xf32>
    %cst_75 = arith.constant 0.000000e+00 : f32
    %258 = vector.broadcast %cst_75 : f32 to vector<1x24xf32>
    %259 = arith.select %253, %257, %258 : vector<1x24xi1>, vector<1x24xf32>
    %260 = vector.shape_cast %259 : vector<1x24xf32> to vector<1x1x24xf32>
    %cst_76 = arith.constant dense<0.000000e+00> : vector<1xf32>
    %261 = vector.multi_reduction <add>, %260, %cst_76 [1, 2] : vector<1x1x24xf32> to vector<1xf32>
    %262 = vector.shape_cast %261 : vector<1xf32> to vector<1x1x1xf32>
    %263 = vector.extract %262[0, 0, 0] : f32 from vector<1x1x1xf32>
    %c10_i32_77 = arith.constant 10 : i32
    %264 = vector.broadcast %c10_i32_77 : i32 to vector<1x24xi32>
    %265 = arith.cmpi eq, %10, %264 : vector<1x24xi32>
    %266 = vector.broadcast %263 : f32 to vector<1x24xf32>
    %267 = arith.select %265, %266, %247 : vector<1x24xi1>, vector<1x24xf32>
    %c138 = arith.constant 138 : index
    %c0_78 = arith.constant 0 : index
    %268 = vector.load %arg2[%c138, %c0_78] : memref<152x24xf32, #tpu.memory_space<vmem>>, vector<1x24xf32>
    %269 = vector.broadcast %263 : f32 to vector<1x24xf32>
    %270 = arith.mulf %269, %268 : vector<1x24xf32>
    %271 = arith.addf %251, %270 : vector<1x24xf32>
    %c11_i32 = arith.constant 11 : i32
    %272 = vector.broadcast %c11_i32 : i32 to vector<1x24xi32>
    %273 = arith.cmpi eq, %10, %272 : vector<1x24xi32>
    %274 = arith.addf %210, %271 : vector<1x24xf32>
    %275 = arith.mulf %274, %201 : vector<1x24xf32>
    %cst_79 = arith.constant 0.000000e+00 : f32
    %276 = vector.broadcast %cst_79 : f32 to vector<1x24xf32>
    %277 = arith.maximumf %275, %276 : vector<1x24xf32>
    %cst_80 = arith.constant 0.000000e+00 : f32
    %278 = vector.broadcast %cst_80 : f32 to vector<1x24xf32>
    %279 = arith.select %273, %277, %278 : vector<1x24xi1>, vector<1x24xf32>
    %280 = vector.shape_cast %279 : vector<1x24xf32> to vector<1x1x24xf32>
    %cst_81 = arith.constant dense<0.000000e+00> : vector<1xf32>
    %281 = vector.multi_reduction <add>, %280, %cst_81 [1, 2] : vector<1x1x24xf32> to vector<1xf32>
    %282 = vector.shape_cast %281 : vector<1xf32> to vector<1x1x1xf32>
    %283 = vector.extract %282[0, 0, 0] : f32 from vector<1x1x1xf32>
    %c11_i32_82 = arith.constant 11 : i32
    %284 = vector.broadcast %c11_i32_82 : i32 to vector<1x24xi32>
    %285 = arith.cmpi eq, %10, %284 : vector<1x24xi32>
    %286 = vector.broadcast %283 : f32 to vector<1x24xf32>
    %287 = arith.select %285, %286, %267 : vector<1x24xi1>, vector<1x24xf32>
    %c139 = arith.constant 139 : index
    %c0_83 = arith.constant 0 : index
    %288 = vector.load %arg2[%c139, %c0_83] : memref<152x24xf32, #tpu.memory_space<vmem>>, vector<1x24xf32>
    %289 = vector.broadcast %283 : f32 to vector<1x24xf32>
    %290 = arith.mulf %289, %288 : vector<1x24xf32>
    %291 = arith.addf %271, %290 : vector<1x24xf32>
    %c12_i32 = arith.constant 12 : i32
    %292 = vector.broadcast %c12_i32 : i32 to vector<1x24xi32>
    %293 = arith.cmpi eq, %10, %292 : vector<1x24xi32>
    %294 = arith.addf %210, %291 : vector<1x24xf32>
    %295 = arith.mulf %294, %201 : vector<1x24xf32>
    %cst_84 = arith.constant 0.000000e+00 : f32
    %296 = vector.broadcast %cst_84 : f32 to vector<1x24xf32>
    %297 = arith.maximumf %295, %296 : vector<1x24xf32>
    %cst_85 = arith.constant 0.000000e+00 : f32
    %298 = vector.broadcast %cst_85 : f32 to vector<1x24xf32>
    %299 = arith.select %293, %297, %298 : vector<1x24xi1>, vector<1x24xf32>
    %300 = vector.shape_cast %299 : vector<1x24xf32> to vector<1x1x24xf32>
    %cst_86 = arith.constant dense<0.000000e+00> : vector<1xf32>
    %301 = vector.multi_reduction <add>, %300, %cst_86 [1, 2] : vector<1x1x24xf32> to vector<1xf32>
    %302 = vector.shape_cast %301 : vector<1xf32> to vector<1x1x1xf32>
    %303 = vector.extract %302[0, 0, 0] : f32 from vector<1x1x1xf32>
    %c12_i32_87 = arith.constant 12 : i32
    %304 = vector.broadcast %c12_i32_87 : i32 to vector<1x24xi32>
    %305 = arith.cmpi eq, %10, %304 : vector<1x24xi32>
    %306 = vector.broadcast %303 : f32 to vector<1x24xf32>
    %307 = arith.select %305, %306, %287 : vector<1x24xi1>, vector<1x24xf32>
    %c140 = arith.constant 140 : index
    %c0_88 = arith.constant 0 : index
    %308 = vector.load %arg2[%c140, %c0_88] : memref<152x24xf32, #tpu.memory_space<vmem>>, vector<1x24xf32>
    %309 = vector.broadcast %303 : f32 to vector<1x24xf32>
    %310 = arith.mulf %309, %308 : vector<1x24xf32>
    %311 = arith.addf %291, %310 : vector<1x24xf32>
    %c13_i32 = arith.constant 13 : i32
    %312 = vector.broadcast %c13_i32 : i32 to vector<1x24xi32>
    %313 = arith.cmpi eq, %10, %312 : vector<1x24xi32>
    %314 = arith.addf %210, %311 : vector<1x24xf32>
    %315 = arith.mulf %314, %201 : vector<1x24xf32>
    %cst_89 = arith.constant 0.000000e+00 : f32
    %316 = vector.broadcast %cst_89 : f32 to vector<1x24xf32>
    %317 = arith.maximumf %315, %316 : vector<1x24xf32>
    %cst_90 = arith.constant 0.000000e+00 : f32
    %318 = vector.broadcast %cst_90 : f32 to vector<1x24xf32>
    %319 = arith.select %313, %317, %318 : vector<1x24xi1>, vector<1x24xf32>
    %320 = vector.shape_cast %319 : vector<1x24xf32> to vector<1x1x24xf32>
    %cst_91 = arith.constant dense<0.000000e+00> : vector<1xf32>
    %321 = vector.multi_reduction <add>, %320, %cst_91 [1, 2] : vector<1x1x24xf32> to vector<1xf32>
    %322 = vector.shape_cast %321 : vector<1xf32> to vector<1x1x1xf32>
    %323 = vector.extract %322[0, 0, 0] : f32 from vector<1x1x1xf32>
    %c13_i32_92 = arith.constant 13 : i32
    %324 = vector.broadcast %c13_i32_92 : i32 to vector<1x24xi32>
    %325 = arith.cmpi eq, %10, %324 : vector<1x24xi32>
    %326 = vector.broadcast %323 : f32 to vector<1x24xf32>
    %327 = arith.select %325, %326, %307 : vector<1x24xi1>, vector<1x24xf32>
    %c141 = arith.constant 141 : index
    %c0_93 = arith.constant 0 : index
    %328 = vector.load %arg2[%c141, %c0_93] : memref<152x24xf32, #tpu.memory_space<vmem>>, vector<1x24xf32>
    %329 = vector.broadcast %323 : f32 to vector<1x24xf32>
    %330 = arith.mulf %329, %328 : vector<1x24xf32>
    %331 = arith.addf %311, %330 : vector<1x24xf32>
    %c14_i32 = arith.constant 14 : i32
    %332 = vector.broadcast %c14_i32 : i32 to vector<1x24xi32>
    %333 = arith.cmpi eq, %10, %332 : vector<1x24xi32>
    %334 = arith.addf %210, %331 : vector<1x24xf32>
    %335 = arith.mulf %334, %201 : vector<1x24xf32>
    %cst_94 = arith.constant 0.000000e+00 : f32
    %336 = vector.broadcast %cst_94 : f32 to vector<1x24xf32>
    %337 = arith.maximumf %335, %336 : vector<1x24xf32>
    %cst_95 = arith.constant 0.000000e+00 : f32
    %338 = vector.broadcast %cst_95 : f32 to vector<1x24xf32>
    %339 = arith.select %333, %337, %338 : vector<1x24xi1>, vector<1x24xf32>
    %340 = vector.shape_cast %339 : vector<1x24xf32> to vector<1x1x24xf32>
    %cst_96 = arith.constant dense<0.000000e+00> : vector<1xf32>
    %341 = vector.multi_reduction <add>, %340, %cst_96 [1, 2] : vector<1x1x24xf32> to vector<1xf32>
    %342 = vector.shape_cast %341 : vector<1xf32> to vector<1x1x1xf32>
    %343 = vector.extract %342[0, 0, 0] : f32 from vector<1x1x1xf32>
    %c14_i32_97 = arith.constant 14 : i32
    %344 = vector.broadcast %c14_i32_97 : i32 to vector<1x24xi32>
    %345 = arith.cmpi eq, %10, %344 : vector<1x24xi32>
    %346 = vector.broadcast %343 : f32 to vector<1x24xf32>
    %347 = arith.select %345, %346, %327 : vector<1x24xi1>, vector<1x24xf32>
    %c142 = arith.constant 142 : index
    %c0_98 = arith.constant 0 : index
    %348 = vector.load %arg2[%c142, %c0_98] : memref<152x24xf32, #tpu.memory_space<vmem>>, vector<1x24xf32>
    %349 = vector.broadcast %343 : f32 to vector<1x24xf32>
    %350 = arith.mulf %349, %348 : vector<1x24xf32>
    %351 = arith.addf %331, %350 : vector<1x24xf32>
    %c15_i32 = arith.constant 15 : i32
    %352 = vector.broadcast %c15_i32 : i32 to vector<1x24xi32>
    %353 = arith.cmpi eq, %10, %352 : vector<1x24xi32>
    %354 = arith.addf %210, %351 : vector<1x24xf32>
    %355 = arith.mulf %354, %201 : vector<1x24xf32>
    %cst_99 = arith.constant 0.000000e+00 : f32
    %356 = vector.broadcast %cst_99 : f32 to vector<1x24xf32>
    %357 = arith.maximumf %355, %356 : vector<1x24xf32>
    %cst_100 = arith.constant 0.000000e+00 : f32
    %358 = vector.broadcast %cst_100 : f32 to vector<1x24xf32>
    %359 = arith.select %353, %357, %358 : vector<1x24xi1>, vector<1x24xf32>
    %360 = vector.shape_cast %359 : vector<1x24xf32> to vector<1x1x24xf32>
    %cst_101 = arith.constant dense<0.000000e+00> : vector<1xf32>
    %361 = vector.multi_reduction <add>, %360, %cst_101 [1, 2] : vector<1x1x24xf32> to vector<1xf32>
    %362 = vector.shape_cast %361 : vector<1xf32> to vector<1x1x1xf32>
    %363 = vector.extract %362[0, 0, 0] : f32 from vector<1x1x1xf32>
    %c15_i32_102 = arith.constant 15 : i32
    %364 = vector.broadcast %c15_i32_102 : i32 to vector<1x24xi32>
    %365 = arith.cmpi eq, %10, %364 : vector<1x24xi32>
    %366 = vector.broadcast %363 : f32 to vector<1x24xf32>
    %367 = arith.select %365, %366, %347 : vector<1x24xi1>, vector<1x24xf32>
    %c1_i32_103 = arith.constant 1 : i32
    %368 = vector.broadcast %c1_i32_103 : i32 to vector<1x24xi32>
    %369 = arith.cmpi eq, %10, %368 : vector<1x24xi32>
    %cst_104 = arith.constant 0.000000e+00 : f32
    %370 = vector.broadcast %cst_104 : f32 to vector<1x24xf32>
    %371 = arith.select %369, %9, %370 : vector<1x24xi1>, vector<1x24xf32>
    %372 = arith.mulf %367, %202 : vector<1x24xf32>
    %373 = arith.addf %371, %372 : vector<1x24xf32>
    %374 = vector.shape_cast %373 : vector<1x24xf32> to vector<1x1x24xf32>
    %cst_105 = arith.constant dense<0.000000e+00> : vector<1xf32>
    %375 = vector.multi_reduction <add>, %374, %cst_105 [1, 2] : vector<1x1x24xf32> to vector<1xf32>
    %376 = vector.shape_cast %375 : vector<1xf32> to vector<1x1x1xf32>
    %377 = vector.extract %376[0, 0, 0] : f32 from vector<1x1x1xf32>
    %378 = arith.mulf %195, %203 : f32
    %379 = arith.addf %377, %378 : f32
    %c1_i32_106 = arith.constant 1 : i32
    %380 = vector.broadcast %c1_i32_106 : i32 to vector<1x3xi32>
    %381 = arith.cmpi eq, %11, %380 : vector<1x3xi32>
    %382 = vector.broadcast %379 : f32 to vector<1x3xf32>
    %383 = arith.select %381, %382, %199 : vector<1x3xi1>, vector<1x3xf32>
    %c106 = arith.constant 106 : index
    %c0_107 = arith.constant 0 : index
    %384 = vector.load %arg2[%c106, %c0_107] : memref<152x24xf32, #tpu.memory_space<vmem>>, vector<1x24xf32>
    %c114 = arith.constant 114 : index
    %c0_108 = arith.constant 0 : index
    %385 = vector.load %arg2[%c114, %c0_108] : memref<152x24xf32, #tpu.memory_space<vmem>>, vector<1x24xf32>
    %c122 = arith.constant 122 : index
    %c0_109 = arith.constant 0 : index
    %386 = vector.load %arg2[%c122, %c0_109] : memref<152x24xf32, #tpu.memory_space<vmem>>, vector<1x24xf32>
    %c4 = arith.constant 4 : index
    %387 = memref.load %arg0[%c4] : memref<5xf32, #tpu.memory_space<smem>>
    %c2_i32_110 = arith.constant 2 : i32
    %388 = vector.broadcast %c2_i32_110 : i32 to vector<1x8xi32>
    %389 = arith.cmpi eq, %12, %388 : vector<1x8xi32>
    %390 = vector.broadcast %379 : f32 to vector<1x8xf32>
    %391 = arith.select %389, %390, %207 : vector<1x8xi1>, vector<1x8xf32>
    %392 = vector.broadcast %379 : f32 to vector<1x24xf32>
    %393 = arith.mulf %392, %384 : vector<1x24xf32>
    %394 = arith.addf %7, %393 : vector<1x24xf32>
    %cst_111 = arith.constant 0.000000e+00 : f32
    %395 = vector.broadcast %cst_111 : f32 to vector<1x24xf32>
    %c16_i32 = arith.constant 16 : i32
    %396 = vector.broadcast %c16_i32 : i32 to vector<1x24xi32>
    %397 = arith.cmpi eq, %10, %396 : vector<1x24xi32>
    %398 = arith.addf %394, %395 : vector<1x24xf32>
    %399 = arith.mulf %398, %385 : vector<1x24xf32>
    %cst_112 = arith.constant 0.000000e+00 : f32
    %400 = vector.broadcast %cst_112 : f32 to vector<1x24xf32>
    %401 = arith.maximumf %399, %400 : vector<1x24xf32>
    %cst_113 = arith.constant 0.000000e+00 : f32
    %402 = vector.broadcast %cst_113 : f32 to vector<1x24xf32>
    %403 = arith.select %397, %401, %402 : vector<1x24xi1>, vector<1x24xf32>
    %404 = vector.shape_cast %403 : vector<1x24xf32> to vector<1x1x24xf32>
    %cst_114 = arith.constant dense<0.000000e+00> : vector<1xf32>
    %405 = vector.multi_reduction <add>, %404, %cst_114 [1, 2] : vector<1x1x24xf32> to vector<1xf32>
    %406 = vector.shape_cast %405 : vector<1xf32> to vector<1x1x1xf32>
    %407 = vector.extract %406[0, 0, 0] : f32 from vector<1x1x1xf32>
    %c16_i32_115 = arith.constant 16 : i32
    %408 = vector.broadcast %c16_i32_115 : i32 to vector<1x24xi32>
    %409 = arith.cmpi eq, %10, %408 : vector<1x24xi32>
    %410 = vector.broadcast %407 : f32 to vector<1x24xf32>
    %411 = arith.select %409, %410, %367 : vector<1x24xi1>, vector<1x24xf32>
    %c144 = arith.constant 144 : index
    %c0_116 = arith.constant 0 : index
    %412 = vector.load %arg2[%c144, %c0_116] : memref<152x24xf32, #tpu.memory_space<vmem>>, vector<1x24xf32>
    %413 = vector.broadcast %407 : f32 to vector<1x24xf32>
    %414 = arith.mulf %413, %412 : vector<1x24xf32>
    %415 = arith.addf %395, %414 : vector<1x24xf32>
    %c17_i32 = arith.constant 17 : i32
    %416 = vector.broadcast %c17_i32 : i32 to vector<1x24xi32>
    %417 = arith.cmpi eq, %10, %416 : vector<1x24xi32>
    %418 = arith.addf %394, %415 : vector<1x24xf32>
    %419 = arith.mulf %418, %385 : vector<1x24xf32>
    %cst_117 = arith.constant 0.000000e+00 : f32
    %420 = vector.broadcast %cst_117 : f32 to vector<1x24xf32>
    %421 = arith.maximumf %419, %420 : vector<1x24xf32>
    %cst_118 = arith.constant 0.000000e+00 : f32
    %422 = vector.broadcast %cst_118 : f32 to vector<1x24xf32>
    %423 = arith.select %417, %421, %422 : vector<1x24xi1>, vector<1x24xf32>
    %424 = vector.shape_cast %423 : vector<1x24xf32> to vector<1x1x24xf32>
    %cst_119 = arith.constant dense<0.000000e+00> : vector<1xf32>
    %425 = vector.multi_reduction <add>, %424, %cst_119 [1, 2] : vector<1x1x24xf32> to vector<1xf32>
    %426 = vector.shape_cast %425 : vector<1xf32> to vector<1x1x1xf32>
    %427 = vector.extract %426[0, 0, 0] : f32 from vector<1x1x1xf32>
    %c17_i32_120 = arith.constant 17 : i32
    %428 = vector.broadcast %c17_i32_120 : i32 to vector<1x24xi32>
    %429 = arith.cmpi eq, %10, %428 : vector<1x24xi32>
    %430 = vector.broadcast %427 : f32 to vector<1x24xf32>
    %431 = arith.select %429, %430, %411 : vector<1x24xi1>, vector<1x24xf32>
    %c145 = arith.constant 145 : index
    %c0_121 = arith.constant 0 : index
    %432 = vector.load %arg2[%c145, %c0_121] : memref<152x24xf32, #tpu.memory_space<vmem>>, vector<1x24xf32>
    %433 = vector.broadcast %427 : f32 to vector<1x24xf32>
    %434 = arith.mulf %433, %432 : vector<1x24xf32>
    %435 = arith.addf %415, %434 : vector<1x24xf32>
    %c18_i32 = arith.constant 18 : i32
    %436 = vector.broadcast %c18_i32 : i32 to vector<1x24xi32>
    %437 = arith.cmpi eq, %10, %436 : vector<1x24xi32>
    %438 = arith.addf %394, %435 : vector<1x24xf32>
    %439 = arith.mulf %438, %385 : vector<1x24xf32>
    %cst_122 = arith.constant 0.000000e+00 : f32
    %440 = vector.broadcast %cst_122 : f32 to vector<1x24xf32>
    %441 = arith.maximumf %439, %440 : vector<1x24xf32>
    %cst_123 = arith.constant 0.000000e+00 : f32
    %442 = vector.broadcast %cst_123 : f32 to vector<1x24xf32>
    %443 = arith.select %437, %441, %442 : vector<1x24xi1>, vector<1x24xf32>
    %444 = vector.shape_cast %443 : vector<1x24xf32> to vector<1x1x24xf32>
    %cst_124 = arith.constant dense<0.000000e+00> : vector<1xf32>
    %445 = vector.multi_reduction <add>, %444, %cst_124 [1, 2] : vector<1x1x24xf32> to vector<1xf32>
    %446 = vector.shape_cast %445 : vector<1xf32> to vector<1x1x1xf32>
    %447 = vector.extract %446[0, 0, 0] : f32 from vector<1x1x1xf32>
    %c18_i32_125 = arith.constant 18 : i32
    %448 = vector.broadcast %c18_i32_125 : i32 to vector<1x24xi32>
    %449 = arith.cmpi eq, %10, %448 : vector<1x24xi32>
    %450 = vector.broadcast %447 : f32 to vector<1x24xf32>
    %451 = arith.select %449, %450, %431 : vector<1x24xi1>, vector<1x24xf32>
    %c146 = arith.constant 146 : index
    %c0_126 = arith.constant 0 : index
    %452 = vector.load %arg2[%c146, %c0_126] : memref<152x24xf32, #tpu.memory_space<vmem>>, vector<1x24xf32>
    %453 = vector.broadcast %447 : f32 to vector<1x24xf32>
    %454 = arith.mulf %453, %452 : vector<1x24xf32>
    %455 = arith.addf %435, %454 : vector<1x24xf32>
    %c19_i32 = arith.constant 19 : i32
    %456 = vector.broadcast %c19_i32 : i32 to vector<1x24xi32>
    %457 = arith.cmpi eq, %10, %456 : vector<1x24xi32>
    %458 = arith.addf %394, %455 : vector<1x24xf32>
    %459 = arith.mulf %458, %385 : vector<1x24xf32>
    %cst_127 = arith.constant 0.000000e+00 : f32
    %460 = vector.broadcast %cst_127 : f32 to vector<1x24xf32>
    %461 = arith.maximumf %459, %460 : vector<1x24xf32>
    %cst_128 = arith.constant 0.000000e+00 : f32
    %462 = vector.broadcast %cst_128 : f32 to vector<1x24xf32>
    %463 = arith.select %457, %461, %462 : vector<1x24xi1>, vector<1x24xf32>
    %464 = vector.shape_cast %463 : vector<1x24xf32> to vector<1x1x24xf32>
    %cst_129 = arith.constant dense<0.000000e+00> : vector<1xf32>
    %465 = vector.multi_reduction <add>, %464, %cst_129 [1, 2] : vector<1x1x24xf32> to vector<1xf32>
    %466 = vector.shape_cast %465 : vector<1xf32> to vector<1x1x1xf32>
    %467 = vector.extract %466[0, 0, 0] : f32 from vector<1x1x1xf32>
    %c19_i32_130 = arith.constant 19 : i32
    %468 = vector.broadcast %c19_i32_130 : i32 to vector<1x24xi32>
    %469 = arith.cmpi eq, %10, %468 : vector<1x24xi32>
    %470 = vector.broadcast %467 : f32 to vector<1x24xf32>
    %471 = arith.select %469, %470, %451 : vector<1x24xi1>, vector<1x24xf32>
    %c147 = arith.constant 147 : index
    %c0_131 = arith.constant 0 : index
    %472 = vector.load %arg2[%c147, %c0_131] : memref<152x24xf32, #tpu.memory_space<vmem>>, vector<1x24xf32>
    %473 = vector.broadcast %467 : f32 to vector<1x24xf32>
    %474 = arith.mulf %473, %472 : vector<1x24xf32>
    %475 = arith.addf %455, %474 : vector<1x24xf32>
    %c20_i32 = arith.constant 20 : i32
    %476 = vector.broadcast %c20_i32 : i32 to vector<1x24xi32>
    %477 = arith.cmpi eq, %10, %476 : vector<1x24xi32>
    %478 = arith.addf %394, %475 : vector<1x24xf32>
    %479 = arith.mulf %478, %385 : vector<1x24xf32>
    %cst_132 = arith.constant 0.000000e+00 : f32
    %480 = vector.broadcast %cst_132 : f32 to vector<1x24xf32>
    %481 = arith.maximumf %479, %480 : vector<1x24xf32>
    %cst_133 = arith.constant 0.000000e+00 : f32
    %482 = vector.broadcast %cst_133 : f32 to vector<1x24xf32>
    %483 = arith.select %477, %481, %482 : vector<1x24xi1>, vector<1x24xf32>
    %484 = vector.shape_cast %483 : vector<1x24xf32> to vector<1x1x24xf32>
    %cst_134 = arith.constant dense<0.000000e+00> : vector<1xf32>
    %485 = vector.multi_reduction <add>, %484, %cst_134 [1, 2] : vector<1x1x24xf32> to vector<1xf32>
    %486 = vector.shape_cast %485 : vector<1xf32> to vector<1x1x1xf32>
    %487 = vector.extract %486[0, 0, 0] : f32 from vector<1x1x1xf32>
    %c20_i32_135 = arith.constant 20 : i32
    %488 = vector.broadcast %c20_i32_135 : i32 to vector<1x24xi32>
    %489 = arith.cmpi eq, %10, %488 : vector<1x24xi32>
    %490 = vector.broadcast %487 : f32 to vector<1x24xf32>
    %491 = arith.select %489, %490, %471 : vector<1x24xi1>, vector<1x24xf32>
    %c148 = arith.constant 148 : index
    %c0_136 = arith.constant 0 : index
    %492 = vector.load %arg2[%c148, %c0_136] : memref<152x24xf32, #tpu.memory_space<vmem>>, vector<1x24xf32>
    %493 = vector.broadcast %487 : f32 to vector<1x24xf32>
    %494 = arith.mulf %493, %492 : vector<1x24xf32>
    %495 = arith.addf %475, %494 : vector<1x24xf32>
    %c21_i32 = arith.constant 21 : i32
    %496 = vector.broadcast %c21_i32 : i32 to vector<1x24xi32>
    %497 = arith.cmpi eq, %10, %496 : vector<1x24xi32>
    %498 = arith.addf %394, %495 : vector<1x24xf32>
    %499 = arith.mulf %498, %385 : vector<1x24xf32>
    %cst_137 = arith.constant 0.000000e+00 : f32
    %500 = vector.broadcast %cst_137 : f32 to vector<1x24xf32>
    %501 = arith.maximumf %499, %500 : vector<1x24xf32>
    %cst_138 = arith.constant 0.000000e+00 : f32
    %502 = vector.broadcast %cst_138 : f32 to vector<1x24xf32>
    %503 = arith.select %497, %501, %502 : vector<1x24xi1>, vector<1x24xf32>
    %504 = vector.shape_cast %503 : vector<1x24xf32> to vector<1x1x24xf32>
    %cst_139 = arith.constant dense<0.000000e+00> : vector<1xf32>
    %505 = vector.multi_reduction <add>, %504, %cst_139 [1, 2] : vector<1x1x24xf32> to vector<1xf32>
    %506 = vector.shape_cast %505 : vector<1xf32> to vector<1x1x1xf32>
    %507 = vector.extract %506[0, 0, 0] : f32 from vector<1x1x1xf32>
    %c21_i32_140 = arith.constant 21 : i32
    %508 = vector.broadcast %c21_i32_140 : i32 to vector<1x24xi32>
    %509 = arith.cmpi eq, %10, %508 : vector<1x24xi32>
    %510 = vector.broadcast %507 : f32 to vector<1x24xf32>
    %511 = arith.select %509, %510, %491 : vector<1x24xi1>, vector<1x24xf32>
    %c149 = arith.constant 149 : index
    %c0_141 = arith.constant 0 : index
    %512 = vector.load %arg2[%c149, %c0_141] : memref<152x24xf32, #tpu.memory_space<vmem>>, vector<1x24xf32>
    %513 = vector.broadcast %507 : f32 to vector<1x24xf32>
    %514 = arith.mulf %513, %512 : vector<1x24xf32>
    %515 = arith.addf %495, %514 : vector<1x24xf32>
    %c22_i32 = arith.constant 22 : i32
    %516 = vector.broadcast %c22_i32 : i32 to vector<1x24xi32>
    %517 = arith.cmpi eq, %10, %516 : vector<1x24xi32>
    %518 = arith.addf %394, %515 : vector<1x24xf32>
    %519 = arith.mulf %518, %385 : vector<1x24xf32>
    %cst_142 = arith.constant 0.000000e+00 : f32
    %520 = vector.broadcast %cst_142 : f32 to vector<1x24xf32>
    %521 = arith.maximumf %519, %520 : vector<1x24xf32>
    %cst_143 = arith.constant 0.000000e+00 : f32
    %522 = vector.broadcast %cst_143 : f32 to vector<1x24xf32>
    %523 = arith.select %517, %521, %522 : vector<1x24xi1>, vector<1x24xf32>
    %524 = vector.shape_cast %523 : vector<1x24xf32> to vector<1x1x24xf32>
    %cst_144 = arith.constant dense<0.000000e+00> : vector<1xf32>
    %525 = vector.multi_reduction <add>, %524, %cst_144 [1, 2] : vector<1x1x24xf32> to vector<1xf32>
    %526 = vector.shape_cast %525 : vector<1xf32> to vector<1x1x1xf32>
    %527 = vector.extract %526[0, 0, 0] : f32 from vector<1x1x1xf32>
    %c22_i32_145 = arith.constant 22 : i32
    %528 = vector.broadcast %c22_i32_145 : i32 to vector<1x24xi32>
    %529 = arith.cmpi eq, %10, %528 : vector<1x24xi32>
    %530 = vector.broadcast %527 : f32 to vector<1x24xf32>
    %531 = arith.select %529, %530, %511 : vector<1x24xi1>, vector<1x24xf32>
    %c150 = arith.constant 150 : index
    %c0_146 = arith.constant 0 : index
    %532 = vector.load %arg2[%c150, %c0_146] : memref<152x24xf32, #tpu.memory_space<vmem>>, vector<1x24xf32>
    %533 = vector.broadcast %527 : f32 to vector<1x24xf32>
    %534 = arith.mulf %533, %532 : vector<1x24xf32>
    %535 = arith.addf %515, %534 : vector<1x24xf32>
    %c23_i32 = arith.constant 23 : i32
    %536 = vector.broadcast %c23_i32 : i32 to vector<1x24xi32>
    %537 = arith.cmpi eq, %10, %536 : vector<1x24xi32>
    %538 = arith.addf %394, %535 : vector<1x24xf32>
    %539 = arith.mulf %538, %385 : vector<1x24xf32>
    %cst_147 = arith.constant 0.000000e+00 : f32
    %540 = vector.broadcast %cst_147 : f32 to vector<1x24xf32>
    %541 = arith.maximumf %539, %540 : vector<1x24xf32>
    %cst_148 = arith.constant 0.000000e+00 : f32
    %542 = vector.broadcast %cst_148 : f32 to vector<1x24xf32>
    %543 = arith.select %537, %541, %542 : vector<1x24xi1>, vector<1x24xf32>
    %544 = vector.shape_cast %543 : vector<1x24xf32> to vector<1x1x24xf32>
    %cst_149 = arith.constant dense<0.000000e+00> : vector<1xf32>
    %545 = vector.multi_reduction <add>, %544, %cst_149 [1, 2] : vector<1x1x24xf32> to vector<1xf32>
    %546 = vector.shape_cast %545 : vector<1xf32> to vector<1x1x1xf32>
    %547 = vector.extract %546[0, 0, 0] : f32 from vector<1x1x1xf32>
    %c23_i32_150 = arith.constant 23 : i32
    %548 = vector.broadcast %c23_i32_150 : i32 to vector<1x24xi32>
    %549 = arith.cmpi eq, %10, %548 : vector<1x24xi32>
    %550 = vector.broadcast %547 : f32 to vector<1x24xf32>
    %551 = arith.select %549, %550, %531 : vector<1x24xi1>, vector<1x24xf32>
    %c2_i32_151 = arith.constant 2 : i32
    %552 = vector.broadcast %c2_i32_151 : i32 to vector<1x24xi32>
    %553 = arith.cmpi eq, %10, %552 : vector<1x24xi32>
    %cst_152 = arith.constant 0.000000e+00 : f32
    %554 = vector.broadcast %cst_152 : f32 to vector<1x24xf32>
    %555 = arith.select %553, %9, %554 : vector<1x24xi1>, vector<1x24xf32>
    %556 = arith.mulf %551, %386 : vector<1x24xf32>
    %557 = arith.addf %555, %556 : vector<1x24xf32>
    %558 = vector.shape_cast %557 : vector<1x24xf32> to vector<1x1x24xf32>
    %cst_153 = arith.constant dense<0.000000e+00> : vector<1xf32>
    %559 = vector.multi_reduction <add>, %558, %cst_153 [1, 2] : vector<1x1x24xf32> to vector<1xf32>
    %560 = vector.shape_cast %559 : vector<1xf32> to vector<1x1x1xf32>
    %561 = vector.extract %560[0, 0, 0] : f32 from vector<1x1x1xf32>
    %562 = arith.mulf %379, %387 : f32
    %563 = arith.addf %561, %562 : f32
    %c2_i32_154 = arith.constant 2 : i32
    %564 = vector.broadcast %c2_i32_154 : i32 to vector<1x3xi32>
    %565 = arith.cmpi eq, %11, %564 : vector<1x3xi32>
    %566 = vector.broadcast %563 : f32 to vector<1x3xf32>
    %567 = arith.select %565, %566, %383 : vector<1x3xi1>, vector<1x3xf32>
    %c48 = arith.constant 48 : index
    %c0_155 = arith.constant 0 : index
    %568 = vector.load %arg2[%c48, %c0_155] : memref<152x24xf32, #tpu.memory_space<vmem>>, vector<24x24xf32>
    %c96 = arith.constant 96 : index
    %c0_156 = arith.constant 0 : index
    %569 = vector.load %arg2[%c96, %c0_156] : memref<152x24xf32, #tpu.memory_space<vmem>>, vector<8x24xf32>
    %cst_157 = arith.constant dense<0.000000e+00> : vector<1x24xf32>
    %570 = tpu.matmul %551, %568, %cst_157 {dimension_numbers = #tpu.dot_dimension_numbers<[1], [0], [0], [1], [0, 0, 1, 1], [], []>} : vector<1x24xf32>, vector<24x24xf32>, vector<1x24xf32> -> vector<1x24xf32>
    %571 = arith.addf %8, %570 : vector<1x24xf32>
    %cst_158 = arith.constant dense<0.000000e+00> : vector<1x24xf32>
    %572 = tpu.matmul %391, %569, %cst_158 {dimension_numbers = #tpu.dot_dimension_numbers<[1], [0], [0], [1], [0, 0, 1, 1], [], []>} : vector<1x8xf32>, vector<8x24xf32>, vector<1x24xf32> -> vector<1x24xf32>
    %573 = arith.addf %571, %572 : vector<1x24xf32>
    %c0_159 = arith.constant 0 : index
    %c0_160 = arith.constant 0 : index
    %574 = vector.load %arg3[%c0_159, %c0_160] : memref<1x3xf32, #tpu.memory_space<vmem>>, vector<1x3xf32>
    tpu.vector_store %arg3[%c0_159, %c0_160], %567 {strides = array<i32>} : memref<1x3xf32, #tpu.memory_space<vmem>>, vector<1x3xf32>,
    %c0_161 = arith.constant 0 : index
    %c0_162 = arith.constant 0 : index
    %575 = vector.load %arg4[%c0_161, %c0_162] : memref<1x24xf32, #tpu.memory_space<vmem>>, vector<1x24xf32>
    tpu.vector_store %arg4[%c0_161, %c0_162], %573 {strides = array<i32>} : memref<1x24xf32, #tpu.memory_space<vmem>>, vector<1x24xf32>,
    return
  }
}

</mosaic_0001>

<llo_original>
// kernel: tpu_custom_call.1
$region0: #{tpu_custom_call.1}
  #allocation0 [shape = 'u32[]', space=smem, size = 0x4, offset = 0x4, fixed_abs, tag = 'smem constant byte address 0x4 - core index']
  #allocation1 [shape = 'u32[144,128]{1,0:T(1,128)}', space=vmem, size = 0x12000, scoped, tag = 'internal scratch']
  %s0 = inlined_call_operand.vmem [shape: f32[5], index: 0, kind: input, shape index: {}]
  %s1 = inlined_call_operand.vmem [shape: f32[1,24], index: 1, kind: input, shape index: {}]
  %s2 = inlined_call_operand.vmem [shape: f32[152,24], index: 2, kind: input, shape index: {}]
  %s3 = inlined_call_operand.hbm [shape: f32[1,3], index: 3, kind: output, shape index: {0}]
  %s4 = inlined_call_operand.hbm [shape: f32[1,24], index: 4, kind: output, shape index: {1}]
  %5 = xla_tuple %s3, %s4
  %s6 = sld [smem:[#allocation0]]
  $region34: #{tpu_custom_call.1} parent=0
    _
  %s8 = ssub.s32 1, %s6
  %s9 = scalar_select 0, %s8, %s6
  $region1: #{tpu_custom_call.1} parent=0
    #allocation2 [shape = 'u8[512]{0}', space=smem, size = 0x200, scoped, tag = 'input window, operand 0, single buffered']
    #allocation3 [shape = 's32[1]{0}', space=sflag, size = 0x4, scoped, tag = 'scoped memory for tpu_custom_call.1']
    #allocation4 [shape = 's32[1]{0}', space=sflag, size = 0x4, scoped, tag = 'scoped memory for tpu_custom_call.1']
    #allocation5 [shape = 'u8[512]{0}', space=vmem, size = 0x400, scoped, tag = 'output window, operand 0, single buffered']
    #allocation6 [shape = 'u8[512]{0}', space=vmem, size = 0x400, scoped, tag = 'output window, operand 1, single buffered']
    #allocation7 [shape = 's32[1]{0}', space=sflag, size = 0x4, scoped, tag = 'scoped memory for tpu_custom_call.1']
    %10 = vsyncpa [#allocation4], 0
    %11 = vsyncpa [#allocation3], 0
    %12 = vsyncpa [#allocation7], 0
    // Predicated region
    $region2: #{tpu_custom_call.1} parent=1 // pred_check
      _
    $region3: #{tpu_custom_call.1} parent=1 // pred_check_branch
      %14 = sbr.rel (0) target = $region5
    $region4: #{tpu_custom_call.1} parent=1 // pred_region
      %s16 = ssub.s32 16, 16
      %17 = vsyncadd [#allocation4], %s16
      %s19 = sshll.u32 %s0, 4
      %s20 = int_to_ptr.vmem [resolvable:$true] %s19
      %22 = dma.vmem_to_smem %s20, 16, [#allocation2], [#allocation4]
    $region5: #{tpu_custom_call.1} parent=1 // pred_fallthru
      _
    // Predicated region
    $region6: #{tpu_custom_call.1} parent=1 // pred_check
      _
    $region7: #{tpu_custom_call.1} parent=1 // pred_check_branch
      %24 = sbr.rel (0) target = $region9
    $region8: #{tpu_custom_call.1} parent=1 // pred_region
      _
    $region9: #{tpu_custom_call.1} parent=1 // pred_fallthru
      _
    // Predicated region
    $region10: #{tpu_custom_call.1} parent=1 // pred_check
      _
    $region11: #{tpu_custom_call.1} parent=1 // pred_check_branch
      %26 = sbr.rel (0) target = $region13
    $region12: #{tpu_custom_call.1} parent=1 // pred_region
      _
    $region13: #{tpu_custom_call.1} parent=1 // pred_fallthru
      _
    // Predicated region
    $region14: #{tpu_custom_call.1} parent=1 // pred_check
      _
    $region15: #{tpu_custom_call.1} parent=1 // pred_check_branch
      %28 = sbr.rel (0) target = $region17
    $region16: #{tpu_custom_call.1} parent=1 // pred_region
      %29 = dma.done [#allocation4], 16
    $region17: #{tpu_custom_call.1} parent=1 // pred_fallthru
      _
    %30 = sfence
    %s31 = sld [smem:[#allocation2]]
    %s32 = sld [smem:[#allocation2 + $0x1]]
    %s33 = ssub.f32 %s32, %s31
    %v34 = vld [vmem:[%s1] sm:$0x1]
    %v35 = vld [vmem:[%s2] sm:$0xff]
    %v36 = vld [vmem:[%s2 + $0x8] sm:$0xff]
    %v37 = vld [vmem:[%s2 + $0x10] sm:$0xff]
    %v38 = vld [vmem:[%s2 + $0x18] sm:$0xff]
    %v39 = vld [vmem:[%s2 + $0x20] sm:$0xff]
    %v40 = vld [vmem:[%s2 + $0x28] sm:$0xff]
    %v41 = vld [vmem:[%s2 + $0x48] sm:$0xff]
    %v42 = vld [vmem:[%s2 + $0x50] sm:$0xff]
    %v43 = vld [vmem:[%s2 + $0x58] sm:$0xff]
    %vm44 = vcmask 195584
    %v46 = vsel %vm44, %v34, 0
    %48 = vmatprep.subr.mxu0 0.0
    %49 = vmatpush1.msra.mxu0 %v35
    %50 = vmatprep.subr.mxu0 0.0
    %51 = vmatpush1.msra.mxu0 %v36
    %52 = vmatprep.subr.mxu0 0.0
    %53 = vmatpush1.msra.mxu0 %v37
    %54 = vmatprep.subr.mxu0 0.0
    %55 = vmatpush1.msra.mxu0 0.0
    %56 = vmatprep.subr.mxu0 0.0
    %57 = vmatpush1.msra.mxu0 0.0
    %58 = vmatprep.subr.mxu0 0.0
    %59 = vmatpush1.msra.mxu0 0.0
    %60 = vmatprep.subr.mxu0 0.0
    %61 = vmatpush1.msra.mxu0 0.0
    %62 = vmatprep.subr.mxu0 0.0
    %63 = vmatpush1.msra.mxu0 0.0
    %64 = vmatprep.subr.mxu0 0.0
    %65 = vmatpush1.msra.mxu0 0.0
    %66 = vmatprep.subr.mxu0 0.0
    %67 = vmatpush1.msra.mxu0 0.0
    %68 = vmatprep.subr.mxu0 0.0
    %69 = vmatpush1.msra.mxu0 0.0
    %70 = vmatprep.subr.mxu0 0.0
    %71 = vmatpush1.msra.mxu0 0.0
    %72 = vmatprep.subr.mxu0 0.0
    %73 = vmatpush1.msra.mxu0 0.0
    %74 = vmatprep.subr.mxu0 0.0
    %75 = vmatpush1.msra.mxu0 0.0
    %76 = vmatprep.subr.mxu0 0.0
    %77 = vmatpush1.msra.mxu0 0.0
    %78 = vmatprep.subr.mxu0 0.0
    %79 = vmatpush1.msra.mxu0 0.0
    %80 = vmatprep.subr.mxu0 0.0
    %81 = vmatpush1.msra.mxu0 0.0
    %82 = vmatprep.subr.mxu0 0.0
    %83 = vmatpush1.msra.mxu0 0.0
    %84 = vmatprep.subr.mxu0 0.0
    %85 = vmatpush1.msra.mxu0 0.0
    %86 = vmatprep.subr.mxu0 0.0
    %87 = vmatpush1.msra.mxu0 0.0
    %88 = vmatprep.subr.mxu0 0.0
    %89 = vmatpush1.msra.mxu0 0.0
    %90 = vmatprep.subr.mxu0 0.0
    %91 = vmatpush1.msra.mxu0 0.0
    %92 = vmatprep.subr.mxu0 0.0
    %93 = vmatpush1.msra.mxu0 0.0
    %94 = vmatprep.subr.mxu0 0.0
    %95 = vmatpush1.msra.mxu0 0.0
    %96 = vmatprep.subr.mxu0 0.0
    %97 = vmatpush1.msra.mxu0 0.0
    %98 = vmatprep.subr.mxu0 0.0
    %99 = vmatpush1.msra.mxu0 0.0
    %100 = vmatprep.subr.mxu0 0.0
    %101 = vmatpush1.msra.mxu0 0.0
    %102 = vmatprep.subr.mxu0 0.0
    %103 = vmatpush1.msra.mxu0 0.0
    %104 = vmatprep.subr.mxu0 0.0
    %105 = vmatpush1.msra.mxu0 0.0
    %106 = vmatprep.subr.mxu0 0.0
    %107 = vmatpush1.msra.mxu0 0.0
    %108 = vmatprep.subr.mxu0 0.0
    %109 = vmatpush1.msra.mxu0 0.0
    %110 = vmatprep.subr.mxu0 0.0
    %111 = vmatpush1.msra.mxu0 0.0
    %112 = vmatprep.mubr.f32.mxu0 0.0
    %113 = vmatmul.mubr.f32.gmra.mrb[0].mxu0 %v46
    %v114 = vpop.f32.mrb[0].mxu0
    %v115 = vadd.f32 0.0, %v114
    %v116 = vpop.f32.mrb[0].mxu0
    %117 = vdwg.mxu0
    %118 = vmatprep.subr.mxu0 0.0
    %119 = vmatpush1.msra.mxu0 %v41
    %120 = vmatprep.subr.mxu0 0.0
    %121 = vmatpush1.msra.mxu0 %v42
    %122 = vmatprep.subr.mxu0 0.0
    %123 = vmatpush1.msra.mxu0 %v43
    %124 = vmatprep.subr.mxu0 0.0
    %125 = vmatpush1.msra.mxu0 0.0
    %126 = vmatprep.subr.mxu0 0.0
    %127 = vmatpush1.msra.mxu0 0.0
    %128 = vmatprep.subr.mxu0 0.0
    %129 = vmatpush1.msra.mxu0 0.0
    %130 = vmatprep.subr.mxu0 0.0
    %131 = vmatpush1.msra.mxu0 0.0
    %132 = vmatprep.subr.mxu0 0.0
    %133 = vmatpush1.msra.mxu0 0.0
    %134 = vmatprep.subr.mxu0 0.0
    %135 = vmatpush1.msra.mxu0 0.0
    %136 = vmatprep.subr.mxu0 0.0
    %137 = vmatpush1.msra.mxu0 0.0
    %138 = vmatprep.subr.mxu0 0.0
    %139 = vmatpush1.msra.mxu0 0.0
    %140 = vmatprep.subr.mxu0 0.0
    %141 = vmatpush1.msra.mxu0 0.0
    %142 = vmatprep.subr.mxu0 0.0
    %143 = vmatpush1.msra.mxu0 0.0
    %144 = vmatprep.subr.mxu0 0.0
    %145 = vmatpush1.msra.mxu0 0.0
    %146 = vmatprep.subr.mxu0 0.0
    %147 = vmatpush1.msra.mxu0 0.0
    %148 = vmatprep.subr.mxu0 0.0
    %149 = vmatpush1.msra.mxu0 0.0
    %150 = vmatprep.subr.mxu0 0.0
    %151 = vmatpush1.msra.mxu0 0.0
    %152 = vmatprep.subr.mxu0 0.0
    %153 = vmatpush1.msra.mxu0 0.0
    %154 = vmatprep.subr.mxu0 0.0
    %155 = vmatpush1.msra.mxu0 0.0
    %156 = vmatprep.subr.mxu0 0.0
    %157 = vmatpush1.msra.mxu0 0.0
    %158 = vmatprep.subr.mxu0 0.0
    %159 = vmatpush1.msra.mxu0 0.0
    %160 = vmatprep.subr.mxu0 0.0
    %161 = vmatpush1.msra.mxu0 0.0
    %162 = vmatprep.subr.mxu0 0.0
    %163 = vmatpush1.msra.mxu0 0.0
    %164 = vmatprep.subr.mxu0 0.0
    %165 = vmatpush1.msra.mxu0 0.0
    %166 = vmatprep.subr.mxu0 0.0
    %167 = vmatpush1.msra.mxu0 0.0
    %168 = vmatprep.subr.mxu0 0.0
    %169 = vmatpush1.msra.mxu0 0.0
    %170 = vmatprep.subr.mxu0 0.0
    %171 = vmatpush1.msra.mxu0 0.0
    %172 = vmatprep.subr.mxu0 0.0
    %173 = vmatpush1.msra.mxu0 0.0
    %174 = vmatprep.subr.mxu0 0.0
    %175 = vmatpush1.msra.mxu0 0.0
    %176 = vmatprep.subr.mxu0 0.0
    %177 = vmatpush1.msra.mxu0 0.0
    %178 = vmatprep.subr.mxu0 0.0
    %179 = vmatpush1.msra.mxu0 0.0
    %180 = vmatprep.subr.mxu0 0.0
    %181 = vmatpush1.msra.mxu0 0.0
    %182 = vmatprep.mubr.f32.mxu0 0.0
    %183 = vmatmul.mubr.f32.gmra.mrb[0].mxu0 %v46
    %v184 = vpop.f32.mrb[0].mxu0
    %v185 = vadd.f32 0.0, %v184
    %v186 = vpop.f32.mrb[0].mxu0
    %187 = vdwg.mxu0
    %v188 = vlaneseq
    %v189 = vand.u32 %v188, 127
    %v190 = vld [vmem:[%s2 + $0x68] sm:$0x1]
    %v191 = vld [vmem:[%s2 + $0x70] sm:$0x1]
    %v192 = vld [vmem:[%s2 + $0x78] sm:$0x1]
    %s193 = sld [smem:[#allocation2 + $0x2]]
    %vm194 = vcmp.eq.s32.totalorder %v189, 0
    %v195 = vstv %s33
    %v196 = vsel %vm194, %v195, 0.0
    %v197 = vmul.f32 %v195, %v190
    %v198 = vadd.f32 %v115, %v197
    %v199 = vadd.f32 %v198, 0.0
    %v200 = vmul.f32 %v199, %v191
    %v201 = vmax.f32 %v200, 0.0
    %v202 = vsel %vm194, %v201, 0.0
    %vm203 = vcmask 188416
    %v204 = vsel %vm203, %v202, 0.0
    %205 = vadd.xlane.f32.xlu0 %v204
    %v206 = vpop.xlane.xlu0 %205
    %v207 = vrot.slane %v206, 4
    %v208 = vadd.f32 %v206, %v207
    %v209 = vrot.slane %v208, 2
    %v210 = vadd.f32 %v208, %v209
    %v211 = vrot.slane %v210, 1
    %v212 = vadd.f32 %v210, %v211
    %s213 = vtos %v212
    %v214 = vstv %s213
    %v215 = vsel %vm194, %v214, 0.0
    %v216 = vld [vmem:[%s2 + $0x80] sm:$0x1]
    %v217 = vmul.f32 %v214, %v216
    %v218 = vadd.f32 %v217, 0.0
    %vm219 = vcmp.eq.s32.totalorder %v189, 1
    %v220 = vadd.f32 %v198, %v218
    %v221 = vmul.f32 %v220, %v191
    %v222 = vmax.f32 %v221, 0.0
    %v223 = vsel %vm219, %v222, 0.0
    %v224 = vsel %vm203, %v223, 0.0
    %225 = vadd.xlane.f32.xlu0 %v224
    %v226 = vpop.xlane.xlu0 %225
    %v227 = vrot.slane %v226, 4
    %v228 = vadd.f32 %v226, %v227
    %v229 = vrot.slane %v228, 2
    %v230 = vadd.f32 %v228, %v229
    %v231 = vrot.slane %v230, 1
    %v232 = vadd.f32 %v230, %v231
    %s233 = vtos %v232
    %v234 = vstv %s233
    %v235 = vsel %vm219, %v234, %v215
    %v236 = vld [vmem:[%s2 + $0x81] sm:$0x1]
    %v237 = vmul.f32 %v234, %v236
    %v238 = vadd.f32 %v218, %v237
    %vm239 = vcmp.eq.s32.totalorder %v189, 2
    %v240 = vadd.f32 %v198, %v238
    %v241 = vmul.f32 %v240, %v191
    %v242 = vmax.f32 %v241, 0.0
    %v243 = vsel %vm239, %v242, 0.0
    %v244 = vsel %vm203, %v243, 0.0
    %245 = vadd.xlane.f32.xlu0 %v244
    %v246 = vpop.xlane.xlu0 %245
    %v247 = vrot.slane %v246, 4
    %v248 = vadd.f32 %v246, %v247
    %v249 = vrot.slane %v248, 2
    %v250 = vadd.f32 %v248, %v249
    %v251 = vrot.slane %v250, 1
    %v252 = vadd.f32 %v250, %v251
    %s253 = vtos %v252
    %v254 = vstv %s253
    %v255 = vsel %vm239, %v254, %v235
    %v256 = vld [vmem:[%s2 + $0x82] sm:$0x1]
    %v257 = vmul.f32 %v254, %v256
    %v258 = vadd.f32 %v238, %v257
    %vm259 = vcmp.eq.s32.totalorder %v189, 3
    %v260 = vadd.f32 %v198, %v258
    %v261 = vmul.f32 %v260, %v191
    %v262 = vmax.f32 %v261, 0.0
    %v263 = vsel %vm259, %v262, 0.0
    %v264 = vsel %vm203, %v263, 0.0
    %265 = vadd.xlane.f32.xlu0 %v264
    %v266 = vpop.xlane.xlu0 %265
    %v267 = vrot.slane %v266, 4
    %v268 = vadd.f32 %v266, %v267
    %v269 = vrot.slane %v268, 2
    %v270 = vadd.f32 %v268, %v269
    %v271 = vrot.slane %v270, 1
    %v272 = vadd.f32 %v270, %v271
    %s273 = vtos %v272
    %v274 = vstv %s273
    %v275 = vsel %vm259, %v274, %v255
    %v276 = vld [vmem:[%s2 + $0x83] sm:$0x1]
    %v277 = vmul.f32 %v274, %v276
    %v278 = vadd.f32 %v258, %v277
    %vm279 = vcmp.eq.s32.totalorder %v189, 4
    %v280 = vadd.f32 %v198, %v278
    %v281 = vmul.f32 %v280, %v191
    %v282 = vmax.f32 %v281, 0.0
    %v283 = vsel %vm279, %v282, 0.0
    %v284 = vsel %vm203, %v283, 0.0
    %285 = vadd.xlane.f32.xlu0 %v284
    %v286 = vpop.xlane.xlu0 %285
    %v287 = vrot.slane %v286, 4
    %v288 = vadd.f32 %v286, %v287
    %v289 = vrot.slane %v288, 2
    %v290 = vadd.f32 %v288, %v289
    %v291 = vrot.slane %v290, 1
    %v292 = vadd.f32 %v290, %v291
    %s293 = vtos %v292
    %v294 = vstv %s293
    %v295 = vsel %vm279, %v294, %v275
    %v296 = vld [vmem:[%s2 + $0x84] sm:$0x1]
    %v297 = vmul.f32 %v294, %v296
    %v298 = vadd.f32 %v278, %v297
    %vm299 = vcmp.eq.s32.totalorder %v189, 5
    %v300 = vadd.f32 %v198, %v298
    %v301 = vmul.f32 %v300, %v191
    %v302 = vmax.f32 %v301, 0.0
    %v303 = vsel %vm299, %v302, 0.0
    %v304 = vsel %vm203, %v303, 0.0
    %305 = vadd.xlane.f32.xlu0 %v304
    %v306 = vpop.xlane.xlu0 %305
    %v307 = vrot.slane %v306, 4
    %v308 = vadd.f32 %v306, %v307
    %v309 = vrot.slane %v308, 2
    %v310 = vadd.f32 %v308, %v309
    %v311 = vrot.slane %v310, 1
    %v312 = vadd.f32 %v310, %v311
    %s313 = vtos %v312
    %v314 = vstv %s313
    %v315 = vsel %vm299, %v314, %v295
    %v316 = vld [vmem:[%s2 + $0x85] sm:$0x1]
    %v317 = vmul.f32 %v314, %v316
    %v318 = vadd.f32 %v298, %v317
    %vm319 = vcmp.eq.s32.totalorder %v189, 6
    %v320 = vadd.f32 %v198, %v318
    %v321 = vmul.f32 %v320, %v191
    %v322 = vmax.f32 %v321, 0.0
    %v323 = vsel %vm319, %v322, 0.0
    %v324 = vsel %vm203, %v323, 0.0
    %325 = vadd.xlane.f32.xlu0 %v324
    %v326 = vpop.xlane.xlu0 %325
    %v327 = vrot.slane %v326, 4
    %v328 = vadd.f32 %v326, %v327
    %v329 = vrot.slane %v328, 2
    %v330 = vadd.f32 %v328, %v329
    %v331 = vrot.slane %v330, 1
    %v332 = vadd.f32 %v330, %v331
    %s333 = vtos %v332
    %v334 = vstv %s333
    %v335 = vsel %vm319, %v334, %v315
    %v336 = vld [vmem:[%s2 + $0x86] sm:$0x1]
    %v337 = vmul.f32 %v334, %v336
    %v338 = vadd.f32 %v318, %v337
    %vm339 = vcmp.eq.s32.totalorder %v189, 7
    %v340 = vadd.f32 %v198, %v338
    %v341 = vmul.f32 %v340, %v191
    %v342 = vmax.f32 %v341, 0.0
    %v343 = vsel %vm339, %v342, 0.0
    %v344 = vsel %vm203, %v343, 0.0
    %345 = vadd.xlane.f32.xlu0 %v344
    %v346 = vpop.xlane.xlu0 %345
    %v347 = vrot.slane %v346, 4
    %v348 = vadd.f32 %v346, %v347
    %v349 = vrot.slane %v348, 2
    %v350 = vadd.f32 %v348, %v349
    %v351 = vrot.slane %v350, 1
    %v352 = vadd.f32 %v350, %v351
    %s353 = vtos %v352
    %v354 = vstv %s353
    %v355 = vsel %vm339, %v354, %v335
    %v356 = vsel %vm194, %v185, 0.0
    %v357 = vmul.f32 %v355, %v192
    %v358 = vadd.f32 %v356, %v357
    %v359 = vsel %vm203, %v358, 0.0
    %360 = vadd.xlane.f32.xlu0 %v359
    %v361 = vpop.xlane.xlu0 %360
    %v362 = vrot.slane %v361, 4
    %v363 = vadd.f32 %v361, %v362
    %v364 = vrot.slane %v363, 2
    %v365 = vadd.f32 %v363, %v364
    %v366 = vrot.slane %v365, 1
    %v367 = vadd.f32 %v365, %v366
    %s368 = vtos %v367
    %s369 = smul.f32 %s33, %s193
    %s370 = sadd.f32 %s368, %s369
    %v371 = vstv %s370
    %v372 = vsel %vm194, %v371, 0.0
    %v373 = vld [vmem:[%s2 + $0x69] sm:$0x1]
    %v374 = vld [vmem:[%s2 + $0x71] sm:$0x1]
    %v375 = vld [vmem:[%s2 + $0x79] sm:$0x1]
    %s376 = sld [smem:[#allocation2 + $0x3]]
    %v377 = vsel %vm219, %v371, %v196
    %v378 = vmul.f32 %v371, %v373
    %v379 = vadd.f32 %v115, %v378
    %vm380 = vcmp.eq.s32.totalorder %v189, 8
    %v381 = vadd.f32 %v379, 0.0
    %v382 = vmul.f32 %v381, %v374
    %v383 = vmax.f32 %v382, 0.0
    %v384 = vsel %vm380, %v383, 0.0
    %v385 = vsel %vm203, %v384, 0.0
    %386 = vadd.xlane.f32.xlu0 %v385
    %v387 = vpop.xlane.xlu0 %386
    %v388 = vrot.slane %v387, 4
    %v389 = vadd.f32 %v387, %v388
    %v390 = vrot.slane %v389, 2
    %v391 = vadd.f32 %v389, %v390
    %v392 = vrot.slane %v391, 1
    %v393 = vadd.f32 %v391, %v392
    %s394 = vtos %v393
    %v395 = vstv %s394
    %v396 = vsel %vm380, %v395, %v355
    %v397 = vld [vmem:[%s2 + $0x88] sm:$0x1]
    %v398 = vmul.f32 %v395, %v397
    %v399 = vadd.f32 %v398, 0.0
    %vm400 = vcmp.eq.s32.totalorder %v189, 9
    %v401 = vadd.f32 %v379, %v399
    %v402 = vmul.f32 %v401, %v374
    %v403 = vmax.f32 %v402, 0.0
    %v404 = vsel %vm400, %v403, 0.0
    %v405 = vsel %vm203, %v404, 0.0
    %406 = vadd.xlane.f32.xlu0 %v405
    %v407 = vpop.xlane.xlu0 %406
    %v408 = vrot.slane %v407, 4
    %v409 = vadd.f32 %v407, %v408
    %v410 = vrot.slane %v409, 2
    %v411 = vadd.f32 %v409, %v410
    %v412 = vrot.slane %v411, 1
    %v413 = vadd.f32 %v411, %v412
    %s414 = vtos %v413
    %v415 = vstv %s414
    %v416 = vsel %vm400, %v415, %v396
    %v417 = vld [vmem:[%s2 + $0x89] sm:$0x1]
    %v418 = vmul.f32 %v415, %v417
    %v419 = vadd.f32 %v399, %v418
    %vm420 = vcmp.eq.s32.totalorder %v189, 10
    %v421 = vadd.f32 %v379, %v419
    %v422 = vmul.f32 %v421, %v374
    %v423 = vmax.f32 %v422, 0.0
    %v424 = vsel %vm420, %v423, 0.0
    %v425 = vsel %vm203, %v424, 0.0
    %426 = vadd.xlane.f32.xlu0 %v425
    %v427 = vpop.xlane.xlu0 %426
    %v428 = vrot.slane %v427, 4
    %v429 = vadd.f32 %v427, %v428
    %v430 = vrot.slane %v429, 2
    %v431 = vadd.f32 %v429, %v430
    %v432 = vrot.slane %v431, 1
    %v433 = vadd.f32 %v431, %v432
    %s434 = vtos %v433
    %v435 = vstv %s434
    %v436 = vsel %vm420, %v435, %v416
    %v437 = vld [vmem:[%s2 + $0x8a] sm:$0x1]
    %v438 = vmul.f32 %v435, %v437
    %v439 = vadd.f32 %v419, %v438
    %vm440 = vcmp.eq.s32.totalorder %v189, 11
    %v441 = vadd.f32 %v379, %v439
    %v442 = vmul.f32 %v441, %v374
    %v443 = vmax.f32 %v442, 0.0
    %v444 = vsel %vm440, %v443, 0.0
    %v445 = vsel %vm203, %v444, 0.0
    %446 = vadd.xlane.f32.xlu0 %v445
    %v447 = vpop.xlane.xlu0 %446
    %v448 = vrot.slane %v447, 4
    %v449 = vadd.f32 %v447, %v448
    %v450 = vrot.slane %v449, 2
    %v451 = vadd.f32 %v449, %v450
    %v452 = vrot.slane %v451, 1
    %v453 = vadd.f32 %v451, %v452
    %s454 = vtos %v453
    %v455 = vstv %s454
    %v456 = vsel %vm440, %v455, %v436
    %v457 = vld [vmem:[%s2 + $0x8b] sm:$0x1]
    %v458 = vmul.f32 %v455, %v457
    %v459 = vadd.f32 %v439, %v458
    %vm460 = vcmp.eq.s32.totalorder %v189, 12
    %v461 = vadd.f32 %v379, %v459
    %v462 = vmul.f32 %v461, %v374
    %v463 = vmax.f32 %v462, 0.0
    %v464 = vsel %vm460, %v463, 0.0
    %v465 = vsel %vm203, %v464, 0.0
    %466 = vadd.xlane.f32.xlu0 %v465
    %v467 = vpop.xlane.xlu0 %466
    %v468 = vrot.slane %v467, 4
    %v469 = vadd.f32 %v467, %v468
    %v470 = vrot.slane %v469, 2
    %v471 = vadd.f32 %v469, %v470
    %v472 = vrot.slane %v471, 1
    %v473 = vadd.f32 %v471, %v472
    %s474 = vtos %v473
    %v475 = vstv %s474
    %v476 = vsel %vm460, %v475, %v456
    %v477 = vld [vmem:[%s2 + $0x8c] sm:$0x1]
    %v478 = vmul.f32 %v475, %v477
    %v479 = vadd.f32 %v459, %v478
    %vm480 = vcmp.eq.s32.totalorder %v189, 13
    %v481 = vadd.f32 %v379, %v479
    %v482 = vmul.f32 %v481, %v374
    %v483 = vmax.f32 %v482, 0.0
    %v484 = vsel %vm480, %v483, 0.0
    %v485 = vsel %vm203, %v484, 0.0
    %486 = vadd.xlane.f32.xlu0 %v485
    %v487 = vpop.xlane.xlu0 %486
    %v488 = vrot.slane %v487, 4
    %v489 = vadd.f32 %v487, %v488
    %v490 = vrot.slane %v489, 2
    %v491 = vadd.f32 %v489, %v490
    %v492 = vrot.slane %v491, 1
    %v493 = vadd.f32 %v491, %v492
    %s494 = vtos %v493
    %v495 = vstv %s494
    %v496 = vsel %vm480, %v495, %v476
    %v497 = vld [vmem:[%s2 + $0x8d] sm:$0x1]
    %v498 = vmul.f32 %v495, %v497
    %v499 = vadd.f32 %v479, %v498
    %vm500 = vcmp.eq.s32.totalorder %v189, 14
    %v501 = vadd.f32 %v379, %v499
    %v502 = vmul.f32 %v501, %v374
    %v503 = vmax.f32 %v502, 0.0
    %v504 = vsel %vm500, %v503, 0.0
    %v505 = vsel %vm203, %v504, 0.0
    %506 = vadd.xlane.f32.xlu0 %v505
    %v507 = vpop.xlane.xlu0 %506
    %v508 = vrot.slane %v507, 4
    %v509 = vadd.f32 %v507, %v508
    %v510 = vrot.slane %v509, 2
    %v511 = vadd.f32 %v509, %v510
    %v512 = vrot.slane %v511, 1
    %v513 = vadd.f32 %v511, %v512
    %s514 = vtos %v513
    %v515 = vstv %s514
    %v516 = vsel %vm500, %v515, %v496
    %v517 = vld [vmem:[%s2 + $0x8e] sm:$0x1]
    %v518 = vmul.f32 %v515, %v517
    %v519 = vadd.f32 %v499, %v518
    %vm520 = vcmp.eq.s32.totalorder %v189, 15
    %v521 = vadd.f32 %v379, %v519
    %v522 = vmul.f32 %v521, %v374
    %v523 = vmax.f32 %v522, 0.0
    %v524 = vsel %vm520, %v523, 0.0
    %v525 = vsel %vm203, %v524, 0.0
    %526 = vadd.xlane.f32.xlu0 %v525
    %v527 = vpop.xlane.xlu0 %526
    %v528 = vrot.slane %v527, 4
    %v529 = vadd.f32 %v527, %v528
    %v530 = vrot.slane %v529, 2
    %v531 = vadd.f32 %v529, %v530
    %v532 = vrot.slane %v531, 1
    %v533 = vadd.f32 %v531, %v532
    %s534 = vtos %v533
    %v535 = vstv %s534
    %v536 = vsel %vm520, %v535, %v516
    %v537 = vsel %vm219, %v185, 0.0
    %v538 = vmul.f32 %v536, %v375
    %v539 = vadd.f32 %v537, %v538
    %v540 = vsel %vm203, %v539, 0.0
    %541 = vadd.xlane.f32.xlu0 %v540
    %v542 = vpop.xlane.xlu0 %541
    %v543 = vrot.slane %v542, 4
    %v544 = vadd.f32 %v542, %v543
    %v545 = vrot.slane %v544, 2
    %v546 = vadd.f32 %v544, %v545
    %v547 = vrot.slane %v546, 1
    %v548 = vadd.f32 %v546, %v547
    %s549 = vtos %v548
    %s550 = smul.f32 %s370, %s376
    %s551 = sadd.f32 %s549, %s550
    %v552 = vstv %s551
    %v553 = vsel %vm219, %v552, %v372
    %v554 = vld [vmem:[%s2 + $0x6a] sm:$0x1]
    %v555 = vld [vmem:[%s2 + $0x72] sm:$0x1]
    %v556 = vld [vmem:[%s2 + $0x7a] sm:$0x1]
    %s557 = sld [smem:[#allocation2 + $0x4]]
    %v558 = vsel %vm239, %v552, %v377
    %v559 = vmul.f32 %v552, %v554
    %v560 = vadd.f32 %v115, %v559
    %vm561 = vcmp.eq.s32.totalorder %v189, 16
    %v562 = vadd.f32 %v560, 0.0
    %v563 = vmul.f32 %v562, %v555
    %v564 = vmax.f32 %v563, 0.0
    %v565 = vsel %vm561, %v564, 0.0
    %v566 = vsel %vm203, %v565, 0.0
    %567 = vadd.xlane.f32.xlu0 %v566
    %v568 = vpop.xlane.xlu0 %567
    %v569 = vrot.slane %v568, 4
    %v570 = vadd.f32 %v568, %v569
    %v571 = vrot.slane %v570, 2
    %v572 = vadd.f32 %v570, %v571
    %v573 = vrot.slane %v572, 1
    %v574 = vadd.f32 %v572, %v573
    %s575 = vtos %v574
    %v576 = vstv %s575
    %v577 = vsel %vm561, %v576, %v536
    %v578 = vld [vmem:[%s2 + $0x90] sm:$0x1]
    %v579 = vmul.f32 %v576, %v578
    %v580 = vadd.f32 %v579, 0.0
    %vm581 = vcmp.eq.s32.totalorder %v189, 17
    %v582 = vadd.f32 %v560, %v580
    %v583 = vmul.f32 %v582, %v555
    %v584 = vmax.f32 %v583, 0.0
    %v585 = vsel %vm581, %v584, 0.0
    %v586 = vsel %vm203, %v585, 0.0
    %587 = vadd.xlane.f32.xlu0 %v586
    %v588 = vpop.xlane.xlu0 %587
    %v589 = vrot.slane %v588, 4
    %v590 = vadd.f32 %v588, %v589
    %v591 = vrot.slane %v590, 2
    %v592 = vadd.f32 %v590, %v591
    %v593 = vrot.slane %v592, 1
    %v594 = vadd.f32 %v592, %v593
    %s595 = vtos %v594
    %v596 = vstv %s595
    %v597 = vsel %vm581, %v596, %v577
    %v598 = vld [vmem:[%s2 + $0x91] sm:$0x1]
    %v599 = vmul.f32 %v596, %v598
    %v600 = vadd.f32 %v580, %v599
    %vm601 = vcmp.eq.s32.totalorder %v189, 18
    %v602 = vadd.f32 %v560, %v600
    %v603 = vmul.f32 %v602, %v555
    %v604 = vmax.f32 %v603, 0.0
    %v605 = vsel %vm601, %v604, 0.0
    %v606 = vsel %vm203, %v605, 0.0
    %607 = vadd.xlane.f32.xlu0 %v606
    %v608 = vpop.xlane.xlu0 %607
    %v609 = vrot.slane %v608, 4
    %v610 = vadd.f32 %v608, %v609
    %v611 = vrot.slane %v610, 2
    %v612 = vadd.f32 %v610, %v611
    %v613 = vrot.slane %v612, 1
    %v614 = vadd.f32 %v612, %v613
    %s615 = vtos %v614
    %v616 = vstv %s615
    %v617 = vsel %vm601, %v616, %v597
    %v618 = vld [vmem:[%s2 + $0x92] sm:$0x1]
    %v619 = vmul.f32 %v616, %v618
    %v620 = vadd.f32 %v600, %v619
    %vm621 = vcmp.eq.s32.totalorder %v189, 19
    %v622 = vadd.f32 %v560, %v620
    %v623 = vmul.f32 %v622, %v555
    %v624 = vmax.f32 %v623, 0.0
    %v625 = vsel %vm621, %v624, 0.0
    %v626 = vsel %vm203, %v625, 0.0
    %627 = vadd.xlane.f32.xlu0 %v626
    %v628 = vpop.xlane.xlu0 %627
    %v629 = vrot.slane %v628, 4
    %v630 = vadd.f32 %v628, %v629
    %v631 = vrot.slane %v630, 2
    %v632 = vadd.f32 %v630, %v631
    %v633 = vrot.slane %v632, 1
    %v634 = vadd.f32 %v632, %v633
    %s635 = vtos %v634
    %v636 = vstv %s635
    %v637 = vsel %vm621, %v636, %v617
    %v638 = vld [vmem:[%s2 + $0x93] sm:$0x1]
    %v639 = vmul.f32 %v636, %v638
    %v640 = vadd.f32 %v620, %v639
    %vm641 = vcmp.eq.s32.totalorder %v189, 20
    %v642 = vadd.f32 %v560, %v640
    %v643 = vmul.f32 %v642, %v555
    %v644 = vmax.f32 %v643, 0.0
    %v645 = vsel %vm641, %v644, 0.0
    %v646 = vsel %vm203, %v645, 0.0
    %647 = vadd.xlane.f32.xlu0 %v646
    %v648 = vpop.xlane.xlu0 %647
    %v649 = vrot.slane %v648, 4
    %v650 = vadd.f32 %v648, %v649
    %v651 = vrot.slane %v650, 2
    %v652 = vadd.f32 %v650, %v651
    %v653 = vrot.slane %v652, 1
    %v654 = vadd.f32 %v652, %v653
    %s655 = vtos %v654
    %v656 = vstv %s655
    %v657 = vsel %vm641, %v656, %v637
    %v658 = vld [vmem:[%s2 + $0x94] sm:$0x1]
    %v659 = vmul.f32 %v656, %v658
    %v660 = vadd.f32 %v640, %v659
    %vm661 = vcmp.eq.s32.totalorder %v189, 21
    %v662 = vadd.f32 %v560, %v660
    %v663 = vmul.f32 %v662, %v555
    %v664 = vmax.f32 %v663, 0.0
    %v665 = vsel %vm661, %v664, 0.0
    %v666 = vsel %vm203, %v665, 0.0
    %667 = vadd.xlane.f32.xlu0 %v666
    %v668 = vpop.xlane.xlu0 %667
    %v669 = vrot.slane %v668, 4
    %v670 = vadd.f32 %v668, %v669
    %v671 = vrot.slane %v670, 2
    %v672 = vadd.f32 %v670, %v671
    %v673 = vrot.slane %v672, 1
    %v674 = vadd.f32 %v672, %v673
    %s675 = vtos %v674
    %v676 = vstv %s675
    %v677 = vsel %vm661, %v676, %v657
    %v678 = vld [vmem:[%s2 + $0x95] sm:$0x1]
    %v679 = vmul.f32 %v676, %v678
    %v680 = vadd.f32 %v660, %v679
    %vm681 = vcmp.eq.s32.totalorder %v189, 22
    %v682 = vadd.f32 %v560, %v680
    %v683 = vmul.f32 %v682, %v555
    %v684 = vmax.f32 %v683, 0.0
    %v685 = vsel %vm681, %v684, 0.0
    %v686 = vsel %vm203, %v685, 0.0
    %687 = vadd.xlane.f32.xlu0 %v686
    %v688 = vpop.xlane.xlu0 %687
    %v689 = vrot.slane %v688, 4
    %v690 = vadd.f32 %v688, %v689
    %v691 = vrot.slane %v690, 2
    %v692 = vadd.f32 %v690, %v691
    %v693 = vrot.slane %v692, 1
    %v694 = vadd.f32 %v692, %v693
    %s695 = vtos %v694
    %v696 = vstv %s695
    %v697 = vsel %vm681, %v696, %v677
    %v698 = vld [vmem:[%s2 + $0x96] sm:$0x1]
    %v699 = vmul.f32 %v696, %v698
    %v700 = vadd.f32 %v680, %v699
    %vm701 = vcmp.eq.s32.totalorder %v189, 23
    %v702 = vadd.f32 %v560, %v700
    %v703 = vmul.f32 %v702, %v555
    %v704 = vmax.f32 %v703, 0.0
    %v705 = vsel %vm701, %v704, 0.0
    %v706 = vsel %vm203, %v705, 0.0
    %707 = vadd.xlane.f32.xlu0 %v706
    %v708 = vpop.xlane.xlu0 %707
    %v709 = vrot.slane %v708, 4
    %v710 = vadd.f32 %v708, %v709
    %v711 = vrot.slane %v710, 2
    %v712 = vadd.f32 %v710, %v711
    %v713 = vrot.slane %v712, 1
    %v714 = vadd.f32 %v712, %v713
    %s715 = vtos %v714
    %v716 = vstv %s715
    %v717 = vsel %vm701, %v716, %v697
    %v718 = vsel %vm239, %v185, 0.0
    %v719 = vmul.f32 %v717, %v556
    %v720 = vadd.f32 %v718, %v719
    %v721 = vsel %vm203, %v720, 0.0
    %722 = vadd.xlane.f32.xlu0 %v721
    %v723 = vpop.xlane.xlu0 %722
    %v724 = vrot.slane %v723, 4
    %v725 = vadd.f32 %v723, %v724
    %v726 = vrot.slane %v725, 2
    %v727 = vadd.f32 %v725, %v726
    %v728 = vrot.slane %v727, 1
    %v729 = vadd.f32 %v727, %v728
    %s730 = vtos %v729
    %s731 = smul.f32 %s551, %s557
    %s732 = sadd.f32 %s730, %s731
    %v733 = vstv %s732
    %v734 = vsel %vm239, %v733, %v553
    %v735 = vld [vmem:[%s2 + $0x30] sm:$0xff]
    %v736 = vld [vmem:[%s2 + $0x38] sm:$0xff]
    %v737 = vld [vmem:[%s2 + $0x40] sm:$0xff]
    %v738 = vld [vmem:[%s2 + $0x60] sm:$0xff]
    %v740 = vsel %vm44, %v717, 0
    %742 = vmatprep.subr.mxu0 0.0
    %743 = vmatpush1.msra.mxu0 %v735
    %744 = vmatprep.subr.mxu0 0.0
    %745 = vmatpush1.msra.mxu0 %v736
    %746 = vmatprep.subr.mxu0 0.0
    %747 = vmatpush1.msra.mxu0 %v737
    %748 = vmatprep.subr.mxu0 0.0
    %749 = vmatpush1.msra.mxu0 0.0
    %750 = vmatprep.subr.mxu0 0.0
    %751 = vmatpush1.msra.mxu0 0.0
    %752 = vmatprep.subr.mxu0 0.0
    %753 = vmatpush1.msra.mxu0 0.0
    %754 = vmatprep.subr.mxu0 0.0
    %755 = vmatpush1.msra.mxu0 0.0
    %756 = vmatprep.subr.mxu0 0.0
    %757 = vmatpush1.msra.mxu0 0.0
    %758 = vmatprep.subr.mxu0 0.0
    %759 = vmatpush1.msra.mxu0 0.0
    %760 = vmatprep.subr.mxu0 0.0
    %761 = vmatpush1.msra.mxu0 0.0
    %762 = vmatprep.subr.mxu0 0.0
    %763 = vmatpush1.msra.mxu0 0.0
    %764 = vmatprep.subr.mxu0 0.0
    %765 = vmatpush1.msra.mxu0 0.0
    %766 = vmatprep.subr.mxu0 0.0
    %767 = vmatpush1.msra.mxu0 0.0
    %768 = vmatprep.subr.mxu0 0.0
    %769 = vmatpush1.msra.mxu0 0.0
    %770 = vmatprep.subr.mxu0 0.0
    %771 = vmatpush1.msra.mxu0 0.0
    %772 = vmatprep.subr.mxu0 0.0
    %773 = vmatpush1.msra.mxu0 0.0
    %774 = vmatprep.subr.mxu0 0.0
    %775 = vmatpush1.msra.mxu0 0.0
    %776 = vmatprep.subr.mxu0 0.0
    %777 = vmatpush1.msra.mxu0 0.0
    %778 = vmatprep.subr.mxu0 0.0
    %779 = vmatpush1.msra.mxu0 0.0
    %780 = vmatprep.subr.mxu0 0.0
    %781 = vmatpush1.msra.mxu0 0.0
    %782 = vmatprep.subr.mxu0 0.0
    %783 = vmatpush1.msra.mxu0 0.0
    %784 = vmatprep.subr.mxu0 0.0
    %785 = vmatpush1.msra.mxu0 0.0
    %786 = vmatprep.subr.mxu0 0.0
    %787 = vmatpush1.msra.mxu0 0.0
    %788 = vmatprep.subr.mxu0 0.0
    %789 = vmatpush1.msra.mxu0 0.0
    %790 = vmatprep.subr.mxu0 0.0
    %791 = vmatpush1.msra.mxu0 0.0
    %792 = vmatprep.subr.mxu0 0.0
    %793 = vmatpush1.msra.mxu0 0.0
    %794 = vmatprep.subr.mxu0 0.0
    %795 = vmatpush1.msra.mxu0 0.0
    %796 = vmatprep.subr.mxu0 0.0
    %797 = vmatpush1.msra.mxu0 0.0
    %798 = vmatprep.subr.mxu0 0.0
    %799 = vmatpush1.msra.mxu0 0.0
    %800 = vmatprep.subr.mxu0 0.0
    %801 = vmatpush1.msra.mxu0 0.0
    %802 = vmatprep.subr.mxu0 0.0
    %803 = vmatpush1.msra.mxu0 0.0
    %804 = vmatprep.subr.mxu0 0.0
    %805 = vmatpush1.msra.mxu0 0.0
    %806 = vmatprep.mubr.f32.mxu0 0.0
    %807 = vmatmul.mubr.f32.gmra.mrb[0].mxu0 %v740
    %v808 = vpop.f32.mrb[0].mxu0
    %v809 = vadd.f32 0.0, %v808
    %v810 = vpop.f32.mrb[0].mxu0
    %811 = vdwg.mxu0
    %812 = vmatprep.subr.mxu0 0.0
    %813 = vmatpush1.msra.mxu0 %v38
    %814 = vmatprep.subr.mxu0 0.0
    %815 = vmatpush1.msra.mxu0 %v39
    %816 = vmatprep.subr.mxu0 0.0
    %817 = vmatpush1.msra.mxu0 %v40
    %818 = vmatprep.subr.mxu0 0.0
    %819 = vmatpush1.msra.mxu0 0.0
    %820 = vmatprep.subr.mxu0 0.0
    %821 = vmatpush1.msra.mxu0 0.0
    %822 = vmatprep.subr.mxu0 0.0
    %823 = vmatpush1.msra.mxu0 0.0
    %824 = vmatprep.subr.mxu0 0.0
    %825 = vmatpush1.msra.mxu0 0.0
    %826 = vmatprep.subr.mxu0 0.0
    %827 = vmatpush1.msra.mxu0 0.0
    %828 = vmatprep.subr.mxu0 0.0
    %829 = vmatpush1.msra.mxu0 0.0
    %830 = vmatprep.subr.mxu0 0.0
    %831 = vmatpush1.msra.mxu0 0.0
    %832 = vmatprep.subr.mxu0 0.0
    %833 = vmatpush1.msra.mxu0 0.0
    %834 = vmatprep.subr.mxu0 0.0
    %835 = vmatpush1.msra.mxu0 0.0
    %836 = vmatprep.subr.mxu0 0.0
    %837 = vmatpush1.msra.mxu0 0.0
    %838 = vmatprep.subr.mxu0 0.0
    %839 = vmatpush1.msra.mxu0 0.0
    %840 = vmatprep.subr.mxu0 0.0
    %841 = vmatpush1.msra.mxu0 0.0
    %842 = vmatprep.subr.mxu0 0.0
    %843 = vmatpush1.msra.mxu0 0.0
    %844 = vmatprep.subr.mxu0 0.0
    %845 = vmatpush1.msra.mxu0 0.0
    %846 = vmatprep.subr.mxu0 0.0
    %847 = vmatpush1.msra.mxu0 0.0
    %848 = vmatprep.subr.mxu0 0.0
    %849 = vmatpush1.msra.mxu0 0.0
    %850 = vmatprep.subr.mxu0 0.0
    %851 = vmatpush1.msra.mxu0 0.0
    %852 = vmatprep.subr.mxu0 0.0
    %853 = vmatpush1.msra.mxu0 0.0
    %854 = vmatprep.subr.mxu0 0.0
    %855 = vmatpush1.msra.mxu0 0.0
    %856 = vmatprep.subr.mxu0 0.0
    %857 = vmatpush1.msra.mxu0 0.0
    %858 = vmatprep.subr.mxu0 0.0
    %859 = vmatpush1.msra.mxu0 0.0
    %860 = vmatprep.subr.mxu0 0.0
    %861 = vmatpush1.msra.mxu0 0.0
    %862 = vmatprep.subr.mxu0 0.0
    %863 = vmatpush1.msra.mxu0 0.0
    %864 = vmatprep.subr.mxu0 0.0
    %865 = vmatpush1.msra.mxu0 0.0
    %866 = vmatprep.subr.mxu0 0.0
    %867 = vmatpush1.msra.mxu0 0.0
    %868 = vmatprep.subr.mxu0 0.0
    %869 = vmatpush1.msra.mxu0 0.0
    %870 = vmatprep.subr.mxu0 0.0
    %871 = vmatpush1.msra.mxu0 0.0
    %872 = vmatprep.subr.mxu0 0.0
    %873 = vmatpush1.msra.mxu0 0.0
    %874 = vmatprep.subr.mxu0 0.0
    %875 = vmatpush1.msra.mxu0 0.0
    %876 = vmatprep.mubr.f32.mxu0 0.0
    %877 = vmatmul.mubr.f32.gmra.mrb[0].mxu0 %v46
    %v878 = vpop.f32.mrb[0].mxu0
    %v879 = vadd.f32 %v809, %v878
    %v880 = vpop.f32.mrb[0].mxu0
    %881 = vdwg.mxu0
    %vm882 = vcmask 64512
    %v884 = vsel %vm882, %v558, 0
    %886 = vmatprep.subr.mxu0 0.0
    %887 = vmatpush1.msra.mxu0 %v738
    %888 = vmatprep.subr.mxu0 0.0
    %889 = vmatpush1.msra.mxu0 0.0
    %890 = vmatprep.subr.mxu0 0.0
    %891 = vmatpush1.msra.mxu0 0.0
    %892 = vmatprep.subr.mxu0 0.0
    %893 = vmatpush1.msra.mxu0 0.0
    %894 = vmatprep.subr.mxu0 0.0
    %895 = vmatpush1.msra.mxu0 0.0
    %896 = vmatprep.subr.mxu0 0.0
    %897 = vmatpush1.msra.mxu0 0.0
    %898 = vmatprep.subr.mxu0 0.0
    %899 = vmatpush1.msra.mxu0 0.0
    %900 = vmatprep.subr.mxu0 0.0
    %901 = vmatpush1.msra.mxu0 0.0
    %902 = vmatprep.subr.mxu0 0.0
    %903 = vmatpush1.msra.mxu0 0.0
    %904 = vmatprep.subr.mxu0 0.0
    %905 = vmatpush1.msra.mxu0 0.0
    %906 = vmatprep.subr.mxu0 0.0
    %907 = vmatpush1.msra.mxu0 0.0
    %908 = vmatprep.subr.mxu0 0.0
    %909 = vmatpush1.msra.mxu0 0.0
    %910 = vmatprep.subr.mxu0 0.0
    %911 = vmatpush1.msra.mxu0 0.0
    %912 = vmatprep.subr.mxu0 0.0
    %913 = vmatpush1.msra.mxu0 0.0
    %914 = vmatprep.subr.mxu0 0.0
    %915 = vmatpush1.msra.mxu0 0.0
    %916 = vmatprep.subr.mxu0 0.0
    %917 = vmatpush1.msra.mxu0 0.0
    %918 = vmatprep.subr.mxu0 0.0
    %919 = vmatpush1.msra.mxu0 0.0
    %920 = vmatprep.subr.mxu0 0.0
    %921 = vmatpush1.msra.mxu0 0.0
    %922 = vmatprep.subr.mxu0 0.0
    %923 = vmatpush1.msra.mxu0 0.0
    %924 = vmatprep.subr.mxu0 0.0
    %925 = vmatpush1.msra.mxu0 0.0
    %926 = vmatprep.subr.mxu0 0.0
    %927 = vmatpush1.msra.mxu0 0.0
    %928 = vmatprep.subr.mxu0 0.0
    %929 = vmatpush1.msra.mxu0 0.0
    %930 = vmatprep.subr.mxu0 0.0
    %931 = vmatpush1.msra.mxu0 0.0
    %932 = vmatprep.subr.mxu0 0.0
    %933 = vmatpush1.msra.mxu0 0.0
    %934 = vmatprep.subr.mxu0 0.0
    %935 = vmatpush1.msra.mxu0 0.0
    %936 = vmatprep.subr.mxu0 0.0
    %937 = vmatpush1.msra.mxu0 0.0
    %938 = vmatprep.subr.mxu0 0.0
    %939 = vmatpush1.msra.mxu0 0.0
    %940 = vmatprep.subr.mxu0 0.0
    %941 = vmatpush1.msra.mxu0 0.0
    %942 = vmatprep.subr.mxu0 0.0
    %943 = vmatpush1.msra.mxu0 0.0
    %944 = vmatprep.subr.mxu0 0.0
    %945 = vmatpush1.msra.mxu0 0.0
    %946 = vmatprep.subr.mxu0 0.0
    %947 = vmatpush1.msra.mxu0 0.0
    %948 = vmatprep.subr.mxu0 0.0
    %949 = vmatpush1.msra.mxu0 0.0
    %950 = vmatprep.mubr.f32.mxu0 0.0
    %951 = vmatmul.mubr.f32.gmra.mrb[0].mxu0 %v884
    %v952 = vpop.f32.mrb[0].mxu0
    %v953 = vadd.f32 0.0, %v952
    %v954 = vpop.f32.mrb[0].mxu0
    %955 = vdwg.mxu0
    %v956 = vadd.f32 %v879, %v953
    %vm957 = vcmask 16384
    %958 = vst.msk [vmem:[#allocation5] sm:$0x1] %vm957, %v734
    %959 = vst.msk [vmem:[#allocation6] sm:$0x1] %vm203, %v956
    // Predicated region
    $region18: #{tpu_custom_call.1} parent=1 // pred_check
      _
    $region19: #{tpu_custom_call.1} parent=1 // pred_check_branch
      %961 = sbr.rel (0) target = $region21
    $region20: #{tpu_custom_call.1} parent=1 // pred_region
      %s963 = ssub.s32 16, 16
      %964 = vsyncadd [#allocation3], %s963
      %s966 = sshll.u32 [#allocation5], 4
      %s967 = int_to_ptr.vmem [resolvable:$true] %s966
      %969 = dma.vmem_to_hbm [thread:$0]  %s967, 16, %s3, [#allocation3]
    $region21: #{tpu_custom_call.1} parent=1 // pred_fallthru
      _
    // Predicated region
    $region22: #{tpu_custom_call.1} parent=1 // pred_check
      _
    $region23: #{tpu_custom_call.1} parent=1 // pred_check_branch
      %971 = sbr.rel (0) target = $region25
    $region24: #{tpu_custom_call.1} parent=1 // pred_region
      %s973 = ssub.s32 16, 16
      %974 = vsyncadd [#allocation7], %s973
      %s976 = sshll.u32 [#allocation6], 4
      %s977 = int_to_ptr.vmem [resolvable:$true] %s976
      %979 = dma.vmem_to_hbm [thread:$0]  %s977, 16, %s4, [#allocation7]
    $region25: #{tpu_custom_call.1} parent=1 // pred_fallthru
      _
    // Predicated region
    $region26: #{tpu_custom_call.1} parent=1 // pred_check
      _
    $region27: #{tpu_custom_call.1} parent=1 // pred_check_branch
      %981 = sbr.rel (0) target = $region29
    $region28: #{tpu_custom_call.1} parent=1 // pred_region
      %982 = dma.done [#allocation3], 16
    $region29: #{tpu_custom_call.1} parent=1 // pred_fallthru
      _
    // Predicated region
    $region30: #{tpu_custom_call.1} parent=1 // pred_check
      _
    $region31: #{tpu_custom_call.1} parent=1 // pred_check_branch
      %984 = sbr.rel (0) target = $region33
    $region32: #{tpu_custom_call.1} parent=1 // pred_region
      %985 = dma.done [#allocation7], 16
    $region33: #{tpu_custom_call.1} parent=1 // pred_fallthru
      _
    %986 = vsyncpa [#allocation3], 1
    %987 = vsyncpa [#allocation7], 1
    %988 = vsyncpa [#allocation4], 1

</llo_original>
